<compile_context>
chip_gen: v7x
topology: tpu7x:2x2x1
jax: 0.10.0
libtpu: 0.0.40
codegen_flags: <defaults>
</compile_context>

<pallas_src>
import functools

import jax
import jax.numpy as jnp
from jax import lax
from jax.experimental import pallas as pl
from jax.experimental.pallas import tpu as pltpu


NEG_INF = float("-inf")


def _choose_tile(T, B):
    """Sequence tile selection.

    Largest of 512/256/128 that divides T while keeping B*(T/t) >= 2 parallel
    grid points (megacore / v7x dual TC); whole-T for small irregular T; else
    128-wide tiles over a zero-padded sequence so the (tq, tk) score tile
    stays O(128*128) on every generation.
    """
    divisors = [c for c in (512, 256, 128) if T % c == 0]
    for cand in divisors:
        if B * (T // cand) >= 2:
            return cand
    if divisors:
        return divisors[0]
    return T if T <= 512 else 128


# ---------------------------------------------------------------------------
# Fused projection + flash attention kernel (online softmax over kv blocks).
# ---------------------------------------------------------------------------
def _head_attn_kernel(xq_ref, xkv_ref, wq_ref, wk_ref, wv_ref, o_ref,
                      q_sc, m_sc, l_sc, acc_sc, *,
                      tq, tk, t_valid, t_padded, masked, mxu_dtype):
    qi = pl.program_id(1)
    ki = pl.program_id(2)

    @pl.when(ki == 0)
    def _init():
        # Project q once per (batch, q-block).  1/sqrt(head_size) is already
        # folded into wq, so no extra scale multiply in the hot loop.
        q = jnp.dot(xq_ref[...].astype(mxu_dtype), wq_ref[...],
                    preferred_element_type=jnp.float32)
        q_sc[...] = q.astype(q_sc.dtype)
        m_sc[...] = jnp.full_like(m_sc, NEG_INF)
        l_sc[...] = jnp.zeros_like(l_sc)
        acc_sc[...] = jnp.zeros_like(acc_sc)

    def _update(mask_fn):
        xkv = xkv_ref[...].astype(mxu_dtype)
        k = jnp.dot(xkv, wk_ref[...],
                    preferred_element_type=jnp.float32).astype(mxu_dtype)
        v = jnp.dot(xkv, wv_ref[...],
                    preferred_element_type=jnp.float32).astype(mxu_dtype)
        # Scores: contract the head axis of q and k directly (no k.T / XLU).
        s = lax.dot_general(
            q_sc[...], k,
            dimension_numbers=(((1,), (1,)), ((), ())),
            preferred_element_type=jnp.float32,
        )  # (tq, tk) f32
        s = mask_fn(s)

        m_prev = m_sc[...]
        m_new = jnp.maximum(m_prev, jnp.max(s, axis=-1, keepdims=True))
        alpha = jnp.exp(m_prev - m_new)
        p = jnp.exp(s - m_new)
        l_sc[...] = alpha * l_sc[...] + jnp.sum(p, axis=-1, keepdims=True)
        acc_sc[...] = alpha * acc_sc[...] + jnp.dot(
            p.astype(mxu_dtype), v, preferred_element_type=jnp.float32)
        m_sc[...] = m_new

    if masked:
        # PyTorch quirk: masked_fill(tril(wei) == 0, -inf)
        #   == mask where (col > row) OR (wei == 0).
        def _diag_mask(s):
            row = qi * tq + lax.broadcasted_iota(jnp.int32, (tq, tk), 0)
            col = ki * tk + lax.broadcasted_iota(jnp.int32, (tq, tk), 1)
            # Zero-padded keys (col >= t_valid) satisfy col > row for every
            # valid row, so no separate padding mask is needed here.
            return jnp.where((col > row) | (s == 0.0), NEG_INF, s)

        def _below_mask(s):
            # Strictly-below-diagonal block: col < row everywhere (tq == tk),
            # only the `wei == 0` quirk can mask entries.
            return jnp.where(s == 0.0, NEG_INF, s)

        pl.when(ki == qi)(lambda: _update(_diag_mask))
        pl.when(ki < qi)(lambda: _update(_below_mask))
        # ki > qi: fully above the diagonal -> no compute; the x_kv index_map
        # is clamped to min(ki, qi) so no DMA is issued for these steps either.
    else:
        if t_padded != t_valid:
            def _pad_mask(s):
                # Rare irregular-T path only: mask the zero-padded keys.
                col = ki * tk + lax.broadcasted_iota(jnp.int32, (tq, tk), 1)
                return jnp.where(col >= t_valid, NEG_INF, s)
            _update(_pad_mask)
        else:
            _update(lambda s: s)

    @pl.when(ki == pl.num_programs(2) - 1)
    def _finalize():
        l = l_sc[...]
        inv = pl.reciprocal(l, approx=True)     # EUP slot, not a VPU divide
        inv = inv * (2.0 - l * inv)             # one Newton step -> ~f32 exact
        o_ref[...] = (acc_sc[...] * inv).astype(o_ref.dtype)


# ---------------------------------------------------------------------------
# Wrapper.
# ---------------------------------------------------------------------------
@functools.partial(jax.jit, static_argnames=("masked", "mxu_dtype"))
def head_forward(x, wq, wk, wv, masked=True, mxu_dtype=None):
    """Single attention head forward.

    x:  (B, T, d_model)
    wq, wk, wv: PyTorch nn.Linear weights, shape (head_size, d_model).
    mxu_dtype: dtype fed to the MXU (default: x.dtype).  Pass jnp.bfloat16
      for full-speed matmuls with f32 inputs (accumulation stays f32).
    Returns (B, T, head_size).  Dropout is identity (eval mode).
    """
    B, T, D = x.shape
    H = wq.shape[0]
    if mxu_dtype is None:
        mxu_dtype = x.dtype
    mxu_dtype = jnp.dtype(mxu_dtype)

    t = _choose_tile(T, B)
    Tp = (T + t - 1) // t * t
    x_in = x if Tp == T else jnp.pad(x, ((0, 0), (0, Tp - T), (0, 0)))
    n_q = Tp // t
    n_kv = Tp // t

    # Weight prep (glue, not hot path): nn.Linear computes x @ W.T; fold the
    # 1/sqrt(head_size) scale into the query weights.
    scale = jnp.asarray(H ** -0.5, dtype=jnp.float32)
    wq_t = (wq.T.astype(jnp.float32) * scale).astype(mxu_dtype)   # (D, H)
    wk_t = wk.T.astype(mxu_dtype)                                 # (D, H)
    wv_t = wv.T.astype(mxu_dtype)                                 # (D, H)

    if masked:
        # Clamp so fully-above-diagonal kv tiles are never DMA'd (Pallas only
        # issues a new DMA when the block index changes).
        kv_map = lambda b, qi, ki: (b, jnp.minimum(ki, qi), 0)
    else:
        kv_map = lambda b, qi, ki: (b, ki, 0)

    itemsize = jnp.dtype(x.dtype).itemsize
    cost = pl.CostEstimate(
        flops=6 * B * Tp * D * H + 4 * B * Tp * Tp * H,
        transcendentals=B * Tp * Tp,
        bytes_accessed=(B * Tp * D * itemsize * (1 + n_kv)
                        + 3 * D * H * itemsize
                        + B * Tp * H * itemsize),
    )

    kernel = functools.partial(
        _head_attn_kernel, tq=t, tk=t, t_valid=T, t_padded=Tp,
        masked=masked, mxu_dtype=mxu_dtype)

    out = pl.pallas_call(
        kernel,
        out_shape=jax.ShapeDtypeStruct((B, Tp, H), x.dtype),
        grid_spec=pltpu.PrefetchScalarGridSpec(
            num_scalar_prefetch=0,
            grid=(B, n_q, n_kv),
            in_specs=[
                # x tile for the query block (resident across the kv loop).
                pl.BlockSpec((pl.Squeezed(), t, D), lambda b, qi, ki: (b, qi, 0)),
                # x tile for the current kv block (clamped when causal).
                pl.BlockSpec((pl.Squeezed(), t, D), kv_map),
                # Index-invariant weights -> fetched once, resident in VMEM.
                pl.BlockSpec((D, H), lambda b, qi, ki: (0, 0)),
                pl.BlockSpec((D, H), lambda b, qi, ki: (0, 0)),
                pl.BlockSpec((D, H), lambda b, qi, ki: (0, 0)),
            ],
            out_specs=pl.BlockSpec((pl.Squeezed(), t, H),
                                   lambda b, qi, ki: (b, qi, 0)),
            scratch_shapes=[
                pltpu.VMEM((t, H), mxu_dtype),    # pre-scaled q block
                pltpu.VMEM((t, 1), jnp.float32),  # running max m
                pltpu.VMEM((t, 1), jnp.float32),  # running denom l
                pltpu.VMEM((t, H), jnp.float32),  # output accumulator
            ],
        ),
        compiler_params=pltpu.CompilerParams(
            dimension_semantics=("parallel", "parallel", "arbitrary"),
            vmem_limit_bytes=32 * 1024 * 1024,
        ),
        cost_estimate=cost,
    )(x_in, x_in, wq_t, wk_t, wv_t)

    return out if Tp == T else out[:, :T]


def head_reference(x, wq, wk, wv, masked=True):
    """Pure-JAX reference mirroring the PyTorch forward exactly."""
    q = x @ wq.T
    k = x @ wk.T
    v = x @ wv.T
    H = wq.shape[0]
    wei = (q @ jnp.swapaxes(k, -2, -1)) * H ** (-0.5)
    if masked:
        T = wei.shape[-1]
        tril_mask = jnp.tril(jnp.ones((T, T), dtype=bool))
        tril_wei = jnp.where(tril_mask, wei, 0.0)
        wei = jnp.where(tril_wei == 0.0, -jnp.inf, wei)
    wei = jax.nn.softmax(wei, axis=-1)
    return wei @ v


if __name__ == "__main__":
    key = jax.random.PRNGKey(0)
    kx, kq, kk, kv, kx2 = jax.random.split(key, 5)

    # Small shapes consistent with the module: batch=2, seq=8, d_model=32,
    # head_size=16.
    B, T, D, H = 2, 8, 32, 16
    x = jax.random.normal(kx, (B, T, D), dtype=jnp.float32)
    bound = 1.0 / (D ** 0.5)
    wq = jax.random.uniform(kq, (H, D), jnp.float32, -bound, bound)
    wk = jax.random.uniform(kk, (H, D), jnp.float32, -bound, bound)
    wv = jax.random.uniform(kv, (H, D), jnp.float32, -bound, bound)

    # 1) Default (f32 MXU) path: exact parity with the PyTorch-style reference.
    out = jax.block_until_ready(head_forward(x, wq, wk, wv, masked=True))
    ref = head_reference(x, wq, wk, wv, masked=True)
    assert out.shape == (B, T, H), out.shape
    assert jnp.allclose(out, ref, atol=2e-3, rtol=2e-3), (
        float(jnp.max(jnp.abs(out - ref))))

    out_nm = jax.block_until_ready(head_forward(x, wq, wk, wv, masked=False))
    ref_nm = head_reference(x, wq, wk, wv, masked=False)
    assert jnp.allclose(out_nm, ref_nm, atol=2e-3, rtol=2e-3)

    # 2) bf16-MXU path (recommended for f32 callers on v6e/v7x); looser
    #    tolerance accounts for bf16 operand rounding.
    out_bf = jax.block_until_ready(
        head_forward(x, wq, wk, wv, masked=True, mxu_dtype=jnp.bfloat16))
    assert jnp.allclose(out_bf, ref, atol=5e-2, rtol=5e-2), (
        float(jnp.max(jnp.abs(out_bf - ref))))

    # 3) Multi-block + irregular-T path: T=600 -> 128-wide tiles over Tp=640
    #    (exercises the clamped causal DMA, diagonal-only masking, padded-key
    #    masking and the online-softmax accumulation across 5 kv blocks).
    T2 = 600
    x2 = jax.random.normal(kx2, (B, T2, D), dtype=jnp.float32)
    out2 = jax.block_until_ready(head_forward(x2, wq, wk, wv, masked=True))
    ref2 = head_reference(x2, wq, wk, wv, masked=True)
    assert out2.shape == (B, T2, H), out2.shape
    assert jnp.allclose(out2, ref2, atol=2e-3, rtol=2e-3), (
        float(jnp.max(jnp.abs(out2 - ref2))))

    out2_nm = jax.block_until_ready(head_forward(x2, wq, wk, wv, masked=False))
    ref2_nm = head_reference(x2, wq, wk, wv, masked=False)
    assert jnp.allclose(out2_nm, ref2_nm, atol=2e-3, rtol=2e-3)

    print("KERNEL_OK")
</pallas_src>

<mosaic_0001>
module attributes {stable_mosaic.version = 11 : i64} {
  func.func @_head_attn_kernel(%arg0: i32, %arg1: i32, %arg2: i32, %arg3: memref<1x8x32xf32, #tpu.memory_space<vmem>>, %arg4: memref<1x8x32xf32, #tpu.memory_space<vmem>>, %arg5: memref<32x16xf32, #tpu.memory_space<vmem>>, %arg6: memref<32x16xf32, #tpu.memory_space<vmem>>, %arg7: memref<32x16xf32, #tpu.memory_space<vmem>>, %arg8: memref<1x8x16xf32, #tpu.memory_space<vmem>>, %arg9: memref<8x16xf32, #tpu.memory_space<vmem>>, %arg10: memref<8x1xf32, #tpu.memory_space<vmem>>, %arg11: memref<8x1xf32, #tpu.memory_space<vmem>>, %arg12: memref<8x16xf32, #tpu.memory_space<vmem>>) attributes {dimension_semantics = [#tpu.dimension_semantics<parallel>, #tpu.dimension_semantics<parallel>, #tpu.dimension_semantics<arbitrary>], iteration_bounds = array<i64: 2, 1, 1>, scalar_prefetch = 0 : i64, scratch_operands = 4 : i64, tpu.core_type = #tpu.core_type<tc>, window_params = [{transform_indices = @transform_0, window_bounds = array<i64: 1, 8, 32>}, {transform_indices = @transform_1, window_bounds = array<i64: 1, 8, 32>}, {pipeline_mode = #tpu.pipeline_mode<synchronous>, transform_indices = @transform_2, window_bounds = array<i64: 32, 16>}, {pipeline_mode = #tpu.pipeline_mode<synchronous>, transform_indices = @transform_3, window_bounds = array<i64: 32, 16>}, {pipeline_mode = #tpu.pipeline_mode<synchronous>, transform_indices = @transform_4, window_bounds = array<i64: 32, 16>}, {transform_indices = @transform_5, window_bounds = array<i64: 1, 8, 16>}]} {
    %c0_i32 = arith.constant 0 : i32
    %0 = arith.cmpi eq, %arg2, %c0_i32 : i32
    %1 = arith.extui %0 : i1 to i32
    %c0_i32_0 = arith.constant 0 : i32
    %2 = arith.cmpi ne, %1, %c0_i32_0 : i32
    scf.if %2 {
      %c0 = arith.constant 0 : index
      %c0_5 = arith.constant 0 : index
      %c0_6 = arith.constant 0 : index
      %12 = vector.load %arg3[%c0, %c0_5, %c0_6] : memref<1x8x32xf32, #tpu.memory_space<vmem>>, vector<1x8x32xf32>
      %13 = vector.shape_cast %12 : vector<1x8x32xf32> to vector<8x32xf32>
      %c0_7 = arith.constant 0 : index
      %c0_8 = arith.constant 0 : index
      %14 = vector.load %arg5[%c0_7, %c0_8] : memref<32x16xf32, #tpu.memory_space<vmem>>, vector<32x16xf32>
      %cst = arith.constant dense<0.000000e+00> : vector<8x16xf32>
      %15 = tpu.matmul %13, %14, %cst {dimension_numbers = #tpu.dot_dimension_numbers<[1], [0], [0], [1], [0, 0, 1, 1], [], []>} : vector<8x32xf32>, vector<32x16xf32>, vector<8x16xf32> -> vector<8x16xf32>
      %c0_9 = arith.constant 0 : index
      %c0_10 = arith.constant 0 : index
      %16 = vector.load %arg9[%c0_9, %c0_10] : memref<8x16xf32, #tpu.memory_space<vmem>>, vector<8x16xf32>
      tpu.vector_store %arg9[%c0_9, %c0_10], %15 {strides = array<i32>} : memref<8x16xf32, #tpu.memory_space<vmem>>, vector<8x16xf32>,
      %cst_11 = arith.constant 0xFF800000 : f32
      %17 = vector.broadcast %cst_11 : f32 to vector<8x1xf32>
      %c0_12 = arith.constant 0 : index
      %c0_13 = arith.constant 0 : index
      %18 = vector.load %arg10[%c0_12, %c0_13] : memref<8x1xf32, #tpu.memory_space<vmem>>, vector<8x1xf32>
      tpu.vector_store %arg10[%c0_12, %c0_13], %17 {strides = array<i32>} : memref<8x1xf32, #tpu.memory_space<vmem>>, vector<8x1xf32>,
      %cst_14 = arith.constant 0.000000e+00 : f32
      %19 = vector.broadcast %cst_14 : f32 to vector<8x1xf32>
      %c0_15 = arith.constant 0 : index
      %c0_16 = arith.constant 0 : index
      %20 = vector.load %arg11[%c0_15, %c0_16] : memref<8x1xf32, #tpu.memory_space<vmem>>, vector<8x1xf32>
      tpu.vector_store %arg11[%c0_15, %c0_16], %19 {strides = array<i32>} : memref<8x1xf32, #tpu.memory_space<vmem>>, vector<8x1xf32>,
      %cst_17 = arith.constant 0.000000e+00 : f32
      %21 = vector.broadcast %cst_17 : f32 to vector<8x16xf32>
      %c0_18 = arith.constant 0 : index
      %c0_19 = arith.constant 0 : index
      %22 = vector.load %arg12[%c0_18, %c0_19] : memref<8x16xf32, #tpu.memory_space<vmem>>, vector<8x16xf32>
      tpu.vector_store %arg12[%c0_18, %c0_19], %21 {strides = array<i32>} : memref<8x16xf32, #tpu.memory_space<vmem>>, vector<8x16xf32>,
    } else {
    }
    %3 = arith.cmpi eq, %arg2, %arg1 : i32
    %4 = arith.extui %3 : i1 to i32
    %c0_i32_1 = arith.constant 0 : i32
    %5 = arith.cmpi ne, %4, %c0_i32_1 : i32
    scf.if %5 {
      %c0 = arith.constant 0 : index
      %c0_5 = arith.constant 0 : index
      %c0_6 = arith.constant 0 : index
      %12 = vector.load %arg4[%c0, %c0_5, %c0_6] : memref<1x8x32xf32, #tpu.memory_space<vmem>>, vector<1x8x32xf32>
      %13 = vector.shape_cast %12 : vector<1x8x32xf32> to vector<8x32xf32>
      %c0_7 = arith.constant 0 : index
      %c0_8 = arith.constant 0 : index
      %14 = vector.load %arg6[%c0_7, %c0_8] : memref<32x16xf32, #tpu.memory_space<vmem>>, vector<32x16xf32>
      %cst = arith.constant dense<0.000000e+00> : vector<8x16xf32>
      %15 = tpu.matmul %13, %14, %cst {dimension_numbers = #tpu.dot_dimension_numbers<[1], [0], [0], [1], [0, 0, 1, 1], [], []>} : vector<8x32xf32>, vector<32x16xf32>, vector<8x16xf32> -> vector<8x16xf32>
      %c0_9 = arith.constant 0 : index
      %c0_10 = arith.constant 0 : index
      %16 = vector.load %arg7[%c0_9, %c0_10] : memref<32x16xf32, #tpu.memory_space<vmem>>, vector<32x16xf32>
      %cst_11 = arith.constant dense<0.000000e+00> : vector<8x16xf32>
      %17 = tpu.matmul %13, %16, %cst_11 {dimension_numbers = #tpu.dot_dimension_numbers<[1], [0], [0], [1], [0, 0, 1, 1], [], []>} : vector<8x32xf32>, vector<32x16xf32>, vector<8x16xf32> -> vector<8x16xf32>
      %c0_12 = arith.constant 0 : index
      %c0_13 = arith.constant 0 : index
      %18 = vector.load %arg9[%c0_12, %c0_13] : memref<8x16xf32, #tpu.memory_space<vmem>>, vector<8x16xf32>
      %cst_14 = arith.constant dense<0.000000e+00> : vector<8x8xf32>
      %19 = tpu.matmul %18, %15, %cst_14 {dimension_numbers = #tpu.dot_dimension_numbers<[1], [1], [0], [0], [0, 0, 1, 0], [], []>} : vector<8x16xf32>, vector<8x16xf32>, vector<8x8xf32> -> vector<8x8xf32>
      %c8_i32 = arith.constant 8 : i32
      %20 = arith.muli %arg1, %c8_i32 : i32
      %21 = tpu.iota {dimensions = array<i32: 0>} : vector<8x8xi32>
      %22 = vector.broadcast %20 : i32 to vector<8x8xi32>
      %23 = arith.addi %22, %21 : vector<8x8xi32>
      %c8_i32_15 = arith.constant 8 : i32
      %24 = arith.muli %arg2, %c8_i32_15 : i32
      %25 = tpu.iota {dimensions = array<i32: 1>} : vector<8x8xi32>
      %26 = vector.broadcast %24 : i32 to vector<8x8xi32>
      %27 = arith.addi %26, %25 : vector<8x8xi32>
      %28 = arith.cmpi sgt, %27, %23 : vector<8x8xi32>
      %cst_16 = arith.constant 0.000000e+00 : f32
      %29 = vector.broadcast %cst_16 : f32 to vector<8x8xf32>
      %30 = arith.cmpf oeq, %19, %29 : vector<8x8xf32>
      %31 = arith.ori %28, %30 : vector<8x8xi1>
      %cst_17 = arith.constant 0xFF800000 : f32
      %32 = vector.broadcast %cst_17 : f32 to vector<8x8xf32>
      %33 = arith.select %31, %32, %19 : vector<8x8xi1>, vector<8x8xf32>
      %c0_18 = arith.constant 0 : index
      %c0_19 = arith.constant 0 : index
      %34 = vector.load %arg10[%c0_18, %c0_19] : memref<8x1xf32, #tpu.memory_space<vmem>>, vector<8x1xf32>
      %cst_20 = arith.constant dense<0xFF800000> : vector<8xf32>
      %35 = vector.multi_reduction <maximumf>, %33, %cst_20 [1] : vector<8x8xf32> to vector<8xf32>
      %36 = vector.shape_cast %35 : vector<8xf32> to vector<8x1xf32>
      %37 = arith.maximumf %34, %36 : vector<8x1xf32>
      %38 = arith.subf %34, %37 : vector<8x1xf32>
      %39 = math.exp %38 : vector<8x1xf32>
      %40 = vector.broadcast %37 : vector<8x1xf32> to vector<8x8xf32>
      %41 = arith.subf %33, %40 : vector<8x8xf32>
      %42 = math.exp %41 : vector<8x8xf32>
      %c0_21 = arith.constant 0 : index
      %c0_22 = arith.constant 0 : index
      %43 = vector.load %arg11[%c0_21, %c0_22] : memref<8x1xf32, #tpu.memory_space<vmem>>, vector<8x1xf32>
      %44 = arith.mulf %39, %43 : vector<8x1xf32>
      %cst_23 = arith.constant dense<0.000000e+00> : vector<8xf32>
      %45 = vector.multi_reduction <add>, %42, %cst_23 [1] : vector<8x8xf32> to vector<8xf32>
      %46 = vector.shape_cast %45 : vector<8xf32> to vector<8x1xf32>
      %47 = arith.addf %44, %46 : vector<8x1xf32>
      %c0_24 = arith.constant 0 : index
      %c0_25 = arith.constant 0 : index
      %48 = vector.load %arg11[%c0_24, %c0_25] : memref<8x1xf32, #tpu.memory_space<vmem>>, vector<8x1xf32>
      tpu.vector_store %arg11[%c0_24, %c0_25], %47 {strides = array<i32>} : memref<8x1xf32, #tpu.memory_space<vmem>>, vector<8x1xf32>,
      %c0_26 = arith.constant 0 : index
      %c0_27 = arith.constant 0 : index
      %49 = vector.load %arg12[%c0_26, %c0_27] : memref<8x16xf32, #tpu.memory_space<vmem>>, vector<8x16xf32>
      %50 = vector.broadcast %39 : vector<8x1xf32> to vector<8x16xf32>
      %51 = arith.mulf %50, %49 : vector<8x16xf32>
      %cst_28 = arith.constant dense<0.000000e+00> : vector<8x16xf32>
      %52 = tpu.matmul %42, %17, %cst_28 {dimension_numbers = #tpu.dot_dimension_numbers<[1], [0], [0], [1], [0, 0, 1, 1], [], []>} : vector<8x8xf32>, vector<8x16xf32>, vector<8x16xf32> -> vector<8x16xf32>
      %53 = arith.addf %51, %52 : vector<8x16xf32>
      %c0_29 = arith.constant 0 : index
      %c0_30 = arith.constant 0 : index
      %54 = vector.load %arg12[%c0_29, %c0_30] : memref<8x16xf32, #tpu.memory_space<vmem>>, vector<8x16xf32>
      tpu.vector_store %arg12[%c0_29, %c0_30], %53 {strides = array<i32>} : memref<8x16xf32, #tpu.memory_space<vmem>>, vector<8x16xf32>,
      %c0_31 = arith.constant 0 : index
      %c0_32 = arith.constant 0 : index
      %55 = vector.load %arg10[%c0_31, %c0_32] : memref<8x1xf32, #tpu.memory_space<vmem>>, vector<8x1xf32>
      tpu.vector_store %arg10[%c0_31, %c0_32], %37 {strides = array<i32>} : memref<8x1xf32, #tpu.memory_space<vmem>>, vector<8x1xf32>,
    } else {
    }
    %6 = arith.cmpi slt, %arg2, %arg1 : i32
    %7 = arith.extui %6 : i1 to i32
    %c0_i32_2 = arith.constant 0 : i32
    %8 = arith.cmpi ne, %7, %c0_i32_2 : i32
    scf.if %8 {
      %c0 = arith.constant 0 : index
      %c0_5 = arith.constant 0 : index
      %c0_6 = arith.constant 0 : index
      %12 = vector.load %arg4[%c0, %c0_5, %c0_6] : memref<1x8x32xf32, #tpu.memory_space<vmem>>, vector<1x8x32xf32>
      %13 = vector.shape_cast %12 : vector<1x8x32xf32> to vector<8x32xf32>
      %c0_7 = arith.constant 0 : index
      %c0_8 = arith.constant 0 : index
      %14 = vector.load %arg6[%c0_7, %c0_8] : memref<32x16xf32, #tpu.memory_space<vmem>>, vector<32x16xf32>
      %cst = arith.constant dense<0.000000e+00> : vector<8x16xf32>
      %15 = tpu.matmul %13, %14, %cst {dimension_numbers = #tpu.dot_dimension_numbers<[1], [0], [0], [1], [0, 0, 1, 1], [], []>} : vector<8x32xf32>, vector<32x16xf32>, vector<8x16xf32> -> vector<8x16xf32>
      %c0_9 = arith.constant 0 : index
      %c0_10 = arith.constant 0 : index
      %16 = vector.load %arg7[%c0_9, %c0_10] : memref<32x16xf32, #tpu.memory_space<vmem>>, vector<32x16xf32>
      %cst_11 = arith.constant dense<0.000000e+00> : vector<8x16xf32>
      %17 = tpu.matmul %13, %16, %cst_11 {dimension_numbers = #tpu.dot_dimension_numbers<[1], [0], [0], [1], [0, 0, 1, 1], [], []>} : vector<8x32xf32>, vector<32x16xf32>, vector<8x16xf32> -> vector<8x16xf32>
      %c0_12 = arith.constant 0 : index
      %c0_13 = arith.constant 0 : index
      %18 = vector.load %arg9[%c0_12, %c0_13] : memref<8x16xf32, #tpu.memory_space<vmem>>, vector<8x16xf32>
      %cst_14 = arith.constant dense<0.000000e+00> : vector<8x8xf32>
      %19 = tpu.matmul %18, %15, %cst_14 {dimension_numbers = #tpu.dot_dimension_numbers<[1], [1], [0], [0], [0, 0, 1, 0], [], []>} : vector<8x16xf32>, vector<8x16xf32>, vector<8x8xf32> -> vector<8x8xf32>
      %cst_15 = arith.constant 0.000000e+00 : f32
      %20 = vector.broadcast %cst_15 : f32 to vector<8x8xf32>
      %21 = arith.cmpf oeq, %19, %20 : vector<8x8xf32>
      %cst_16 = arith.constant 0xFF800000 : f32
      %22 = vector.broadcast %cst_16 : f32 to vector<8x8xf32>
      %23 = arith.select %21, %22, %19 : vector<8x8xi1>, vector<8x8xf32>
      %c0_17 = arith.constant 0 : index
      %c0_18 = arith.constant 0 : index
      %24 = vector.load %arg10[%c0_17, %c0_18] : memref<8x1xf32, #tpu.memory_space<vmem>>, vector<8x1xf32>
      %cst_19 = arith.constant dense<0xFF800000> : vector<8xf32>
      %25 = vector.multi_reduction <maximumf>, %23, %cst_19 [1] : vector<8x8xf32> to vector<8xf32>
      %26 = vector.shape_cast %25 : vector<8xf32> to vector<8x1xf32>
      %27 = arith.maximumf %24, %26 : vector<8x1xf32>
      %28 = arith.subf %24, %27 : vector<8x1xf32>
      %29 = math.exp %28 : vector<8x1xf32>
      %30 = vector.broadcast %27 : vector<8x1xf32> to vector<8x8xf32>
      %31 = arith.subf %23, %30 : vector<8x8xf32>
      %32 = math.exp %31 : vector<8x8xf32>
      %c0_20 = arith.constant 0 : index
      %c0_21 = arith.constant 0 : index
      %33 = vector.load %arg11[%c0_20, %c0_21] : memref<8x1xf32, #tpu.memory_space<vmem>>, vector<8x1xf32>
      %34 = arith.mulf %29, %33 : vector<8x1xf32>
      %cst_22 = arith.constant dense<0.000000e+00> : vector<8xf32>
      %35 = vector.multi_reduction <add>, %32, %cst_22 [1] : vector<8x8xf32> to vector<8xf32>
      %36 = vector.shape_cast %35 : vector<8xf32> to vector<8x1xf32>
      %37 = arith.addf %34, %36 : vector<8x1xf32>
      %c0_23 = arith.constant 0 : index
      %c0_24 = arith.constant 0 : index
      %38 = vector.load %arg11[%c0_23, %c0_24] : memref<8x1xf32, #tpu.memory_space<vmem>>, vector<8x1xf32>
      tpu.vector_store %arg11[%c0_23, %c0_24], %37 {strides = array<i32>} : memref<8x1xf32, #tpu.memory_space<vmem>>, vector<8x1xf32>,
      %c0_25 = arith.constant 0 : index
      %c0_26 = arith.constant 0 : index
      %39 = vector.load %arg12[%c0_25, %c0_26] : memref<8x16xf32, #tpu.memory_space<vmem>>, vector<8x16xf32>
      %40 = vector.broadcast %29 : vector<8x1xf32> to vector<8x16xf32>
      %41 = arith.mulf %40, %39 : vector<8x16xf32>
      %cst_27 = arith.constant dense<0.000000e+00> : vector<8x16xf32>
      %42 = tpu.matmul %32, %17, %cst_27 {dimension_numbers = #tpu.dot_dimension_numbers<[1], [0], [0], [1], [0, 0, 1, 1], [], []>} : vector<8x8xf32>, vector<8x16xf32>, vector<8x16xf32> -> vector<8x16xf32>
      %43 = arith.addf %41, %42 : vector<8x16xf32>
      %c0_28 = arith.constant 0 : index
      %c0_29 = arith.constant 0 : index
      %44 = vector.load %arg12[%c0_28, %c0_29] : memref<8x16xf32, #tpu.memory_space<vmem>>, vector<8x16xf32>
      tpu.vector_store %arg12[%c0_28, %c0_29], %43 {strides = array<i32>} : memref<8x16xf32, #tpu.memory_space<vmem>>, vector<8x16xf32>,
      %c0_30 = arith.constant 0 : index
      %c0_31 = arith.constant 0 : index
      %45 = vector.load %arg10[%c0_30, %c0_31] : memref<8x1xf32, #tpu.memory_space<vmem>>, vector<8x1xf32>
      tpu.vector_store %arg10[%c0_30, %c0_31], %27 {strides = array<i32>} : memref<8x1xf32, #tpu.memory_space<vmem>>, vector<8x1xf32>,
    } else {
    }
    %c0_i32_3 = arith.constant 0 : i32
    %9 = arith.cmpi eq, %arg2, %c0_i32_3 : i32
    %10 = arith.extui %9 : i1 to i32
    %c0_i32_4 = arith.constant 0 : i32
    %11 = arith.cmpi ne, %10, %c0_i32_4 : i32
    scf.if %11 {
      %c0 = arith.constant 0 : index
      %c0_5 = arith.constant 0 : index
      %12 = vector.load %arg11[%c0, %c0_5] : memref<8x1xf32, #tpu.memory_space<vmem>>, vector<8x1xf32>
      %13 = tpu.reciprocal %12 {approx = true} : vector<8x1xf32> -> vector<8x1xf32>
      %14 = arith.mulf %12, %13 : vector<8x1xf32>
      %cst = arith.constant 2.000000e+00 : f32
      %15 = vector.broadcast %cst : f32 to vector<8x1xf32>
      %16 = arith.subf %15, %14 : vector<8x1xf32>
      %17 = arith.mulf %13, %16 : vector<8x1xf32>
      %c0_6 = arith.constant 0 : index
      %c0_7 = arith.constant 0 : index
      %18 = vector.load %arg12[%c0_6, %c0_7] : memref<8x16xf32, #tpu.memory_space<vmem>>, vector<8x16xf32>
      %19 = vector.broadcast %17 : vector<8x1xf32> to vector<8x16xf32>
      %20 = arith.mulf %18, %19 : vector<8x16xf32>
      %c0_8 = arith.constant 0 : index
      %c0_9 = arith.constant 0 : index
      %c0_10 = arith.constant 0 : index
      %21 = vector.load %arg8[%c0_8, %c0_9, %c0_10] : memref<1x8x16xf32, #tpu.memory_space<vmem>>, vector<1x8x16xf32>
      %22 = vector.shape_cast %21 : vector<1x8x16xf32> to vector<8x16xf32>
      %23 = vector.shape_cast %20 : vector<8x16xf32> to vector<1x8x16xf32>
      tpu.vector_store %arg8[%c0_8, %c0_9, %c0_10], %23 {strides = array<i32>} : memref<1x8x16xf32, #tpu.memory_space<vmem>>, vector<1x8x16xf32>,
    } else {
    }
    return
  }
  func.func @transform_0(%arg0: i32, %arg1: i32, %arg2: i32) -> (i32, i32, i32) {
    %c0_i32 = arith.constant 0 : i32
    %c0_i32_0 = arith.constant 0 : i32
    return %arg0, %arg1, %c0_i32 : i32, i32, i32
  }
  func.func @transform_1(%arg0: i32, %arg1: i32, %arg2: i32) -> (i32, i32, i32) {
    %0 = arith.minsi %arg2, %arg1 : i32
    %c0_i32 = arith.constant 0 : i32
    %c0_i32_0 = arith.constant 0 : i32
    return %arg0, %0, %c0_i32 : i32, i32, i32
  }
  func.func @transform_2(%arg0: i32, %arg1: i32, %arg2: i32) -> (i32, i32) {
    %c0_i32 = arith.constant 0 : i32
    %c0_i32_0 = arith.constant 0 : i32
    %c0_i32_1 = arith.constant 0 : i32
    return %c0_i32, %c0_i32_0 : i32, i32
  }
  func.func @transform_3(%arg0: i32, %arg1: i32, %arg2: i32) -> (i32, i32) {
    %c0_i32 = arith.constant 0 : i32
    %c0_i32_0 = arith.constant 0 : i32
    %c0_i32_1 = arith.constant 0 : i32
    return %c0_i32, %c0_i32_0 : i32, i32
  }
  func.func @transform_4(%arg0: i32, %arg1: i32, %arg2: i32) -> (i32, i32) {
    %c0_i32 = arith.constant 0 : i32
    %c0_i32_0 = arith.constant 0 : i32
    %c0_i32_1 = arith.constant 0 : i32
    return %c0_i32, %c0_i32_0 : i32, i32
  }
  func.func @transform_5(%arg0: i32, %arg1: i32, %arg2: i32) -> (i32, i32, i32) {
    %c0_i32 = arith.constant 0 : i32
    %c0_i32_0 = arith.constant 0 : i32
    return %arg0, %arg1, %c0_i32 : i32, i32, i32
  }
}

</mosaic_0001>

<llo_original>
// kernel: head_forward.1
$region0: #{head_forward.1}
  #allocation0 [shape = 'u32[]', space=smem, size = 0x4, offset = 0x4, fixed_abs, tag = 'smem constant byte address 0x4 - core index']
  #allocation1 [shape = 'u32[144,128]{1,0:T(1,128)}', space=vmem, size = 0x12000, scoped, tag = 'internal scratch']
  #allocation2 [shape = 'f32[8,16]{1,0:T(8,128)}', space=vmem, size = 0x1000, scoped, tag = 'scratch operand']
  #allocation3 [shape = 'f32[8,1]{1,0:T(8,128)}', space=vmem, size = 0x1000, scoped, tag = 'scratch operand']
  #allocation4 [shape = 'f32[8,1]{1,0:T(8,128)}', space=vmem, size = 0x1000, scoped, tag = 'scratch operand']
  #allocation5 [shape = 'f32[8,16]{1,0:T(8,128)}', space=vmem, size = 0x1000, scoped, tag = 'scratch operand']
  %s0 = inlined_call_operand.vmem [shape: f32[2,8,32], index: 0, kind: input, shape index: {}, may-alias: {0,1}]
  %s1 = inlined_call_operand.vmem [shape: f32[2,8,32], index: 1, kind: input, shape index: {}, may-alias: {0,1}]
  %s2 = inlined_call_operand.vmem [shape: f32[32,16], index: 2, kind: input, shape index: {}]
  %s3 = inlined_call_operand.vmem [shape: f32[32,16], index: 3, kind: input, shape index: {}]
  %s4 = inlined_call_operand.vmem [shape: f32[32,16], index: 4, kind: input, shape index: {}]
  %s5 = inlined_call_operand.hbm [shape: f32[2,8,16], index: 5, kind: output, shape index: {}]
  %s6 = sld [smem:[#allocation0]]
  $region69: #{head_forward.1} parent=0
    _
  %s8 = ssub.s32 1, %s6
  %s9 = scalar_select 0, %s8, %s6
  $region1: #{head_forward.1} parent=0
    #allocation6 [shape = 'u8[8192]{0}', space=vmem, size = 0x2000, scoped, tag = 'output window, operand 0']
    #allocation7 [shape = 's32[2]{0}', space=sflag, size = 0x8, scoped, tag = 'scoped memory for head_forward.1']
    %10 = vsyncpa [#allocation7], 0
    %s11 = scalar_lea.sflag [#allocation7], 1
    %12 = vsyncpa %s11, 0
    loop: start=0, step=1, limit=4
    $region2: #{head_forward.1} parent=1 // loop_pre_header
      _
    $region3: #{head_forward.1} parent=1 // loop_header
      %s14 = sphi 0, %s18
      %p15 = scmp.ge.s32.totalorder %s14, 4
      %s21 = sphi 0, %s40
      %s22 = sphi 0, %s36
      %s23 = sphi 0, %s32
      %s24 = sphi 0, %s21
      %s25 = sphi 0, %s22
      %s26 = sphi 0, %s23
      %s27 = sphi 0, %s24
      %s28 = sphi 0, %s25
      %s29 = sphi 0, %s26
      %s45 = sphi 0, %s47
      %s48 = sphi 0, %s45
      %s49 = sphi 0, %s48
      %s65 = sphi 0, %s49
      %s77 = sphi 0, %s79
      %s80 = sphi 0, %s77
      %s81 = sphi 0, %s80
      %s97 = sphi 0, %s81
      %s101 = sphi 0, %s101
      %s103 = sphi 0, %s101
      %s104 = sphi 0, %s103
      %s118 = sphi 0, %s104
      %s122 = sphi 0, %s122
      %s124 = sphi 0, %s122
      %s125 = sphi 0, %s124
      %s139 = sphi 0, %s125
      %s143 = sphi 0, %s143
      %s145 = sphi 0, %s143
      %s146 = sphi 0, %s145
      %s160 = sphi 0, %s146
      %s168 = sphi 0, %s170
      %s171 = sphi 0, %s168
      %s172 = sphi 0, %s171
      %s188 = sphi 0, %s172
    $region4: #{head_forward.1} parent=1 // loop_header_branch
      %17 = sbr.rel (%p15) target = $region8
    $region5: #{head_forward.1} parent=1 // loop_body
      %s19 = ssub.s32 %s14, 1
      %s20 = ssub.s32 %s14, 2
      %s30 = sadd.s32 1, %s23
      %p31 = scmp.ge.s32.totalorder %s30, 1
      %s32 = scalar_select %p31, 0, %s30
      %s33 = sadd.s32 1, %s22
      %s34 = scalar_select %p31, %s33, %s22
      %p35 = scmp.ge.s32.totalorder %s34, 1
      %s36 = scalar_select %p35, 0, %s34
      %s37 = sadd.s32 1, %s21
      %s38 = scalar_select %p35, %s37, %s21
      %p39 = scmp.ge.s32.totalorder %s38, 2
      %s40 = scalar_select %p39, 0, %s38
      %s41 = ssub.s32 %s21, %s40
      %s42 = ssub.s32 %s22, %s36
      %s43 = sor.u32 %s41, %s42
      %p44 = scmp.eq.s32.totalorder %s43, 0
      %s46 = sadd.s32 %s45, 1
      %s47 = scalar_select %p44, %s45, %s46
      %p50 = pneg %p44
      %p51 = scmp.eq.s32.totalorder %s14, 1
      %p52 = por %p50, %p51
      %p53 = scmp.ne.s32.totalorder %s45, %s48
      %p54 = scmp.eq.s32.totalorder %s14, 0
      %p55 = por %p53, %p54
      %p56 = scmp.ne.s32.totalorder %s45, %s48
      %p57 = scmp.eq.s32.totalorder %s19, 1
      %p58 = por %p56, %p57
      %p59 = scmp.ne.s32.totalorder %s48, %s49
      %p60 = scmp.eq.s32.totalorder %s19, 0
      %p61 = por %p59, %p60
      %p62 = scmp.ne.s32.totalorder %s48, %s49
      %p63 = scmp.eq.s32.totalorder %s20, 1
      %p64 = por %p62, %p63
      %p66 = scmp.ne.s32.totalorder %s49, %s65
      %p67 = scmp.eq.s32.totalorder %s20, 0
      %p68 = por %p66, %p67
      %p69 = scmp.lt.s32.totalorder %s23, %s22
      %s70 = scalar_select %p69, %s23, %s22
      %p71 = scmp.lt.s32.totalorder %s32, %s36
      %s72 = scalar_select %p71, %s32, %s36
      %s73 = ssub.s32 %s21, %s40
      %s74 = ssub.s32 %s70, %s72
      %s75 = sor.u32 %s73, %s74
      %p76 = scmp.eq.s32.totalorder %s75, 0
      %s78 = sadd.s32 %s77, 1
      %s79 = scalar_select %p76, %s77, %s78
      %p82 = pneg %p76
      %p83 = scmp.eq.s32.totalorder %s14, 1
      %p84 = por %p82, %p83
      %p85 = scmp.ne.s32.totalorder %s77, %s80
      %p86 = scmp.eq.s32.totalorder %s14, 0
      %p87 = por %p85, %p86
      %p88 = scmp.ne.s32.totalorder %s77, %s80
      %p89 = scmp.eq.s32.totalorder %s19, 1
      %p90 = por %p88, %p89
      %p91 = scmp.ne.s32.totalorder %s80, %s81
      %p92 = scmp.eq.s32.totalorder %s19, 0
      %p93 = por %p91, %p92
      %p94 = scmp.ne.s32.totalorder %s80, %s81
      %p95 = scmp.eq.s32.totalorder %s20, 1
      %p96 = por %p94, %p95
      %p98 = scmp.ne.s32.totalorder %s81, %s97
      %p99 = scmp.eq.s32.totalorder %s20, 0
      %p100 = por %p98, %p99
      %s102 = sadd.s32 %s101, 1
      %p105 = scmp.eq.s32.totalorder %s14, 1
      %p106 = scmp.ne.s32.totalorder %s101, %s103
      %p107 = scmp.eq.s32.totalorder %s14, 0
      %p108 = por %p106, %p107
      %p109 = scmp.ne.s32.totalorder %s101, %s103
      %p110 = scmp.eq.s32.totalorder %s19, 1
      %p111 = por %p109, %p110
      %p112 = scmp.ne.s32.totalorder %s103, %s104
      %p113 = scmp.eq.s32.totalorder %s19, 0
      %p114 = por %p112, %p113
      %p115 = scmp.ne.s32.totalorder %s103, %s104
      %p116 = scmp.eq.s32.totalorder %s20, 1
      %p117 = por %p115, %p116
      %p119 = scmp.ne.s32.totalorder %s104, %s118
      %p120 = scmp.eq.s32.totalorder %s20, 0
      %p121 = por %p119, %p120
      %s123 = sadd.s32 %s122, 1
      %p126 = scmp.eq.s32.totalorder %s14, 1
      %p127 = scmp.ne.s32.totalorder %s122, %s124
      %p128 = scmp.eq.s32.totalorder %s14, 0
      %p129 = por %p127, %p128
      %p130 = scmp.ne.s32.totalorder %s122, %s124
      %p131 = scmp.eq.s32.totalorder %s19, 1
      %p132 = por %p130, %p131
      %p133 = scmp.ne.s32.totalorder %s124, %s125
      %p134 = scmp.eq.s32.totalorder %s19, 0
      %p135 = por %p133, %p134
      %p136 = scmp.ne.s32.totalorder %s124, %s125
      %p137 = scmp.eq.s32.totalorder %s20, 1
      %p138 = por %p136, %p137
      %p140 = scmp.ne.s32.totalorder %s125, %s139
      %p141 = scmp.eq.s32.totalorder %s20, 0
      %p142 = por %p140, %p141
      %s144 = sadd.s32 %s143, 1
      %p147 = scmp.eq.s32.totalorder %s14, 1
      %p148 = scmp.ne.s32.totalorder %s143, %s145
      %p149 = scmp.eq.s32.totalorder %s14, 0
      %p150 = por %p148, %p149
      %p151 = scmp.ne.s32.totalorder %s143, %s145
      %p152 = scmp.eq.s32.totalorder %s19, 1
      %p153 = por %p151, %p152
      %p154 = scmp.ne.s32.totalorder %s145, %s146
      %p155 = scmp.eq.s32.totalorder %s19, 0
      %p156 = por %p154, %p155
      %p157 = scmp.ne.s32.totalorder %s145, %s146
      %p158 = scmp.eq.s32.totalorder %s20, 1
      %p159 = por %p157, %p158
      %p161 = scmp.ne.s32.totalorder %s146, %s160
      %p162 = scmp.eq.s32.totalorder %s20, 0
      %p163 = por %p161, %p162
      %s164 = ssub.s32 %s21, %s40
      %s165 = ssub.s32 %s22, %s36
      %s166 = sor.u32 %s164, %s165
      %p167 = scmp.eq.s32.totalorder %s166, 0
      %s169 = sadd.s32 %s168, 1
      %s170 = scalar_select %p167, %s168, %s169
      %p173 = pneg %p167
      %p174 = scmp.eq.s32.totalorder %s14, 1
      %p175 = por %p173, %p174
      %p176 = scmp.ne.s32.totalorder %s168, %s171
      %p177 = scmp.eq.s32.totalorder %s14, 0
      %p178 = por %p176, %p177
      %p179 = scmp.ne.s32.totalorder %s168, %s171
      %p180 = scmp.eq.s32.totalorder %s19, 1
      %p181 = por %p179, %p180
      %p182 = scmp.ne.s32.totalorder %s171, %s172
      %p183 = scmp.eq.s32.totalorder %s19, 0
      %p184 = por %p182, %p183
      %p185 = scmp.ne.s32.totalorder %s171, %s172
      %p186 = scmp.eq.s32.totalorder %s20, 1
      %p187 = por %p185, %p186
      %p189 = scmp.ne.s32.totalorder %s172, %s188
      %p190 = scmp.eq.s32.totalorder %s20, 0
      %p191 = por %p189, %p190
      %p192 = scmp.le.s32.totalorder 1, %s14
      %p193 = scmp.lt.s32.totalorder %s14, 3
      %p194 = pnand %p192, %p193
      %p195 = pneg %p194
      // Predicated region
      $region9: #{head_forward.1} parent=5 // pred_check
        _
      $region10: #{head_forward.1} parent=5 // pred_check_branch
        %197 = sbr.rel (%p194) target = $region12
      $region11: #{head_forward.1} parent=5 // pred_region
        %s198 = ssub.s32 %s14, 1
        // Predicated region
        $region13: #{head_forward.1} parent=11 // pred_check
          %p199 = pneg %p114
        $region14: #{head_forward.1} parent=11 // pred_check_branch
          %201 = sbr.rel (%p199) target = $region16
        $region15: #{head_forward.1} parent=11 // pred_region
          _
        $region16: #{head_forward.1} parent=11 // pred_fallthru
          _
        // Predicated region
        $region17: #{head_forward.1} parent=11 // pred_check
          %p202 = pneg %p135
        $region18: #{head_forward.1} parent=11 // pred_check_branch
          %204 = sbr.rel (%p202) target = $region20
        $region19: #{head_forward.1} parent=11 // pred_region
          _
        $region20: #{head_forward.1} parent=11 // pred_fallthru
          _
        // Predicated region
        $region21: #{head_forward.1} parent=11 // pred_check
          %p205 = pneg %p156
        $region22: #{head_forward.1} parent=11 // pred_check_branch
          %207 = sbr.rel (%p205) target = $region24
        $region23: #{head_forward.1} parent=11 // pred_region
          _
        $region24: #{head_forward.1} parent=11 // pred_fallthru
          _
      $region12: #{head_forward.1} parent=5 // pred_fallthru
        _
      %p208 = scmp.lt.s32.totalorder %s14, 2
      // Predicated region
      $region25: #{head_forward.1} parent=5 // pred_check
        %p209 = pneg %p208
      $region26: #{head_forward.1} parent=5 // pred_check_branch
        %211 = sbr.rel (%p209) target = $region28
      $region27: #{head_forward.1} parent=5 // pred_region
        // Predicated region
        $region29: #{head_forward.1} parent=27 // pred_check
          %p212 = pneg %p55
        $region30: #{head_forward.1} parent=27 // pred_check_branch
          %214 = sbr.rel (%p212) target = $region32
        $region31: #{head_forward.1} parent=27 // pred_region
          %p215 = scmp.lt.s32.totalorder %s21, 1
          %s216 = scalar_select %p215, %s21, 1
          %p217 = scmp.lt.s32.totalorder %s22, 0
          %s218 = scalar_select %p217, %s22, 0
          %s219 = sadd.s32 %s218, %s216
          %s220 = smul.addr %s219, 8
          %s221 = scalar_lea.vmem %s0, %s220
        $region32: #{head_forward.1} parent=27 // pred_fallthru
          _
        // Predicated region
        $region33: #{head_forward.1} parent=27 // pred_check
          %p222 = pneg %p87
        $region34: #{head_forward.1} parent=27 // pred_check_branch
          %224 = sbr.rel (%p222) target = $region36
        $region35: #{head_forward.1} parent=27 // pred_region
          %p225 = scmp.lt.s32.totalorder %s23, %s22
          %s226 = scalar_select %p225, %s23, %s22
          %p227 = scmp.lt.s32.totalorder %s21, 1
          %s228 = scalar_select %p227, %s21, 1
          %p229 = scmp.lt.s32.totalorder %s226, 0
          %s230 = scalar_select %p229, %s226, 0
          %s231 = sadd.s32 %s230, %s228
          %s232 = smul.addr %s231, 8
          %s233 = scalar_lea.vmem %s1, %s232
          %p234 = scmp.lt.s32.totalorder %s23, %s22
          %s235 = scalar_select %p234, %s23, %s22
        $region36: #{head_forward.1} parent=27 // pred_fallthru
          _
      $region28: #{head_forward.1} parent=5 // pred_fallthru
        _
      %p236 = scmp.le.s32.totalorder 1, %s14
      %p237 = scmp.lt.s32.totalorder %s14, 3
      %p238 = pnand %p236, %p237
      %p239 = pneg %p238
      // Predicated region
      $region37: #{head_forward.1} parent=5 // pred_check
        _
      $region38: #{head_forward.1} parent=5 // pred_check_branch
        %241 = sbr.rel (%p238) target = $region40
      $region39: #{head_forward.1} parent=5 // pred_region
        %s242 = ssub.s32 %s14, 1
        %p243 = scmp.lt.s32.totalorder %s24, 1
        %s244 = scalar_select %p243, %s24, 1
        %p245 = scmp.lt.s32.totalorder %s25, 0
        %s246 = scalar_select %p245, %s25, 0
        %s247 = sadd.s32 %s246, %s244
        %s248 = smul.addr %s247, 8
        %s249 = scalar_lea.vmem %s0, %s248
        %p250 = pneg %p61
        %p251 = pneg %p58
        %p252 = scmp.lt.s32.totalorder %s26, %s25
        %s253 = scalar_select %p252, %s26, %s25
        %p254 = scmp.lt.s32.totalorder %s24, 1
        %s255 = scalar_select %p254, %s24, 1
        %p256 = scmp.lt.s32.totalorder %s253, 0
        %s257 = scalar_select %p256, %s253, 0
        %s258 = sadd.s32 %s257, %s255
        %s259 = smul.addr %s258, 8
        %s260 = scalar_lea.vmem %s1, %s259
        %p261 = pneg %p93
        %p262 = pneg %p90
        %p263 = pneg %p114
        %p264 = pneg %p111
        %p265 = pneg %p135
        %p266 = pneg %p132
        %p267 = pneg %p156
        %p268 = pneg %p153
        %p269 = pneg %p184
        %p270 = pneg %p181
        %s271 = sand.u32 %s171, 1
        %s272 = scalar_lea.sflag [#allocation7], %s271
        %s273 = sand.u32 %s171, 1
        %s274 = smul.addr %s273, 8
        %s275 = scalar_lea.vmem [#allocation6], %s274
        %p276 = scmp.lt.s32.totalorder %s24, 1
        %s277 = scalar_select %p276, %s24, 1
        %p278 = scmp.lt.s32.totalorder %s25, 0
        %s279 = scalar_select %p278, %s25, 0
        %s280 = sadd.s32 %s279, %s277
        %s281 = smul.addr %s280, 8
        %s282 = scalar_lea.vmem %s0, %s281
        %p283 = scmp.lt.s32.totalorder %s26, %s25
        %s284 = scalar_select %p283, %s26, %s25
        %p285 = scmp.lt.s32.totalorder %s24, 1
        %s286 = scalar_select %p285, %s24, 1
        %p287 = scmp.lt.s32.totalorder %s284, 0
        %s288 = scalar_select %p287, %s284, 0
        %s289 = sadd.s32 %s288, %s286
        %s290 = smul.addr %s289, 8
        %s291 = scalar_lea.vmem %s1, %s290
        %p292 = scmp.lt.s32.totalorder %s26, %s25
        %s293 = scalar_select %p292, %s26, %s25
        %p294 = scmp.eq.s32.totalorder %s26, 0
        // Predicated region
        $region41: #{head_forward.1} parent=39 // pred_check
          %p295 = pneg %p294
        $region42: #{head_forward.1} parent=39 // pred_check_branch
          %297 = sbr.rel (%p295) target = $region44
        $region43: #{head_forward.1} parent=39 // pred_region
          %v298 = vld [vmem:[%s282] sm:$0xff]
          %v299 = vld [vmem:[%s2] sm:$0xff]
          %v300 = vld [vmem:[%s2 + $0x8] sm:$0xff]
          %v301 = vld [vmem:[%s2 + $0x10] sm:$0xff]
          %v302 = vld [vmem:[%s2 + $0x18] sm:$0xff]
          %vm303 = vcmask 261120
          %v305 = vsel %vm303, %v298, 0
          %307 = vmatprep.subr.mxu0 0.0
          %308 = vmatpush1.msra.mxu0 %v299
          %309 = vmatprep.subr.mxu0 0.0
          %310 = vmatpush1.msra.mxu0 %v300
          %311 = vmatprep.subr.mxu0 0.0
          %312 = vmatpush1.msra.mxu0 %v301
          %313 = vmatprep.subr.mxu0 0.0
          %314 = vmatpush1.msra.mxu0 %v302
          %315 = vmatprep.subr.mxu0 0.0
          %316 = vmatpush1.msra.mxu0 0.0
          %317 = vmatprep.subr.mxu0 0.0
          %318 = vmatpush1.msra.mxu0 0.0
          %319 = vmatprep.subr.mxu0 0.0
          %320 = vmatpush1.msra.mxu0 0.0
          %321 = vmatprep.subr.mxu0 0.0
          %322 = vmatpush1.msra.mxu0 0.0
          %323 = vmatprep.subr.mxu0 0.0
          %324 = vmatpush1.msra.mxu0 0.0
          %325 = vmatprep.subr.mxu0 0.0
          %326 = vmatpush1.msra.mxu0 0.0
          %327 = vmatprep.subr.mxu0 0.0
          %328 = vmatpush1.msra.mxu0 0.0
          %329 = vmatprep.subr.mxu0 0.0
          %330 = vmatpush1.msra.mxu0 0.0
          %331 = vmatprep.subr.mxu0 0.0
          %332 = vmatpush1.msra.mxu0 0.0
          %333 = vmatprep.subr.mxu0 0.0
          %334 = vmatpush1.msra.mxu0 0.0
          %335 = vmatprep.subr.mxu0 0.0
          %336 = vmatpush1.msra.mxu0 0.0
          %337 = vmatprep.subr.mxu0 0.0
          %338 = vmatpush1.msra.mxu0 0.0
          %339 = vmatprep.subr.mxu0 0.0
          %340 = vmatpush1.msra.mxu0 0.0
          %341 = vmatprep.subr.mxu0 0.0
          %342 = vmatpush1.msra.mxu0 0.0
          %343 = vmatprep.subr.mxu0 0.0
          %344 = vmatpush1.msra.mxu0 0.0
          %345 = vmatprep.subr.mxu0 0.0
          %346 = vmatpush1.msra.mxu0 0.0
          %347 = vmatprep.subr.mxu0 0.0
          %348 = vmatpush1.msra.mxu0 0.0
          %349 = vmatprep.subr.mxu0 0.0
          %350 = vmatpush1.msra.mxu0 0.0
          %351 = vmatprep.subr.mxu0 0.0
          %352 = vmatpush1.msra.mxu0 0.0
          %353 = vmatprep.subr.mxu0 0.0
          %354 = vmatpush1.msra.mxu0 0.0
          %355 = vmatprep.subr.mxu0 0.0
          %356 = vmatpush1.msra.mxu0 0.0
          %357 = vmatprep.subr.mxu0 0.0
          %358 = vmatpush1.msra.mxu0 0.0
          %359 = vmatprep.subr.mxu0 0.0
          %360 = vmatpush1.msra.mxu0 0.0
          %361 = vmatprep.subr.mxu0 0.0
          %362 = vmatpush1.msra.mxu0 0.0
          %363 = vmatprep.subr.mxu0 0.0
          %364 = vmatpush1.msra.mxu0 0.0
          %365 = vmatprep.subr.mxu0 0.0
          %366 = vmatpush1.msra.mxu0 0.0
          %367 = vmatprep.subr.mxu0 0.0
          %368 = vmatpush1.msra.mxu0 0.0
          %369 = vmatprep.subr.mxu0 0.0
          %370 = vmatpush1.msra.mxu0 0.0
          %371 = vmatprep.mubr.f32.mxu0 0.0
          %372 = vmatmul.mubr.f32.gmra.mrb[0].mxu0 %v305
          %v373 = vpop.f32.mrb[0].mxu0
          %v374 = vadd.f32 0.0, %v373
          %v375 = vpop.f32.mrb[0].mxu0
          %376 = vdwg.mxu0
          %vm377 = vcmask 130048
          %378 = vst.msk [vmem:[#allocation2] sm:$0xff] %vm377, %v374
          %vm379 = vcmask 7168
          %380 = vst.msk [vmem:[#allocation3] sm:$0xff] %vm379, -inf
          %381 = vst.msk [vmem:[#allocation4] sm:$0xff] %vm379, 0.0
          %382 = vst.msk [vmem:[#allocation5] sm:$0xff] %vm377, 0.0
        $region44: #{head_forward.1} parent=39 // pred_fallthru
          _
        %p383 = scmp.eq.s32.totalorder %s26, %s25
        // Predicated region
        $region45: #{head_forward.1} parent=39 // pred_check
          %p384 = pneg %p383
        $region46: #{head_forward.1} parent=39 // pred_check_branch
          %386 = sbr.rel (%p384) target = $region48
        $region47: #{head_forward.1} parent=39 // pred_region
          %v387 = vld [vmem:[%s291] sm:$0xff]
          %v388 = vld [vmem:[%s3] sm:$0xff]
          %v389 = vld [vmem:[%s3 + $0x8] sm:$0xff]
          %v390 = vld [vmem:[%s3 + $0x10] sm:$0xff]
          %v391 = vld [vmem:[%s3 + $0x18] sm:$0xff]
          %vm392 = vcmask 261120
          %v394 = vsel %vm392, %v387, 0
          %396 = vmatprep.subr.mxu0 0.0
          %397 = vmatpush1.msra.mxu0 %v388
          %398 = vmatprep.subr.mxu0 0.0
          %399 = vmatpush1.msra.mxu0 %v389
          %400 = vmatprep.subr.mxu0 0.0
          %401 = vmatpush1.msra.mxu0 %v390
          %402 = vmatprep.subr.mxu0 0.0
          %403 = vmatpush1.msra.mxu0 %v391
          %404 = vmatprep.subr.mxu0 0.0
          %405 = vmatpush1.msra.mxu0 0.0
          %406 = vmatprep.subr.mxu0 0.0
          %407 = vmatpush1.msra.mxu0 0.0
          %408 = vmatprep.subr.mxu0 0.0
          %409 = vmatpush1.msra.mxu0 0.0
          %410 = vmatprep.subr.mxu0 0.0
          %411 = vmatpush1.msra.mxu0 0.0
          %412 = vmatprep.subr.mxu0 0.0
          %413 = vmatpush1.msra.mxu0 0.0
          %414 = vmatprep.subr.mxu0 0.0
          %415 = vmatpush1.msra.mxu0 0.0
          %416 = vmatprep.subr.mxu0 0.0
          %417 = vmatpush1.msra.mxu0 0.0
          %418 = vmatprep.subr.mxu0 0.0
          %419 = vmatpush1.msra.mxu0 0.0
          %420 = vmatprep.subr.mxu0 0.0
          %421 = vmatpush1.msra.mxu0 0.0
          %422 = vmatprep.subr.mxu0 0.0
          %423 = vmatpush1.msra.mxu0 0.0
          %424 = vmatprep.subr.mxu0 0.0
          %425 = vmatpush1.msra.mxu0 0.0
          %426 = vmatprep.subr.mxu0 0.0
          %427 = vmatpush1.msra.mxu0 0.0
          %428 = vmatprep.subr.mxu0 0.0
          %429 = vmatpush1.msra.mxu0 0.0
          %430 = vmatprep.subr.mxu0 0.0
          %431 = vmatpush1.msra.mxu0 0.0
          %432 = vmatprep.subr.mxu0 0.0
          %433 = vmatpush1.msra.mxu0 0.0
          %434 = vmatprep.subr.mxu0 0.0
          %435 = vmatpush1.msra.mxu0 0.0
          %436 = vmatprep.subr.mxu0 0.0
          %437 = vmatpush1.msra.mxu0 0.0
          %438 = vmatprep.subr.mxu0 0.0
          %439 = vmatpush1.msra.mxu0 0.0
          %440 = vmatprep.subr.mxu0 0.0
          %441 = vmatpush1.msra.mxu0 0.0
          %442 = vmatprep.subr.mxu0 0.0
          %443 = vmatpush1.msra.mxu0 0.0
          %444 = vmatprep.subr.mxu0 0.0
          %445 = vmatpush1.msra.mxu0 0.0
          %446 = vmatprep.subr.mxu0 0.0
          %447 = vmatpush1.msra.mxu0 0.0
          %448 = vmatprep.subr.mxu0 0.0
          %449 = vmatpush1.msra.mxu0 0.0
          %450 = vmatprep.subr.mxu0 0.0
          %451 = vmatpush1.msra.mxu0 0.0
          %452 = vmatprep.subr.mxu0 0.0
          %453 = vmatpush1.msra.mxu0 0.0
          %454 = vmatprep.subr.mxu0 0.0
          %455 = vmatpush1.msra.mxu0 0.0
          %456 = vmatprep.subr.mxu0 0.0
          %457 = vmatpush1.msra.mxu0 0.0
          %458 = vmatprep.subr.mxu0 0.0
          %459 = vmatpush1.msra.mxu0 0.0
          %460 = vmatprep.mubr.f32.mxu0 0.0
          %461 = vmatmul.mubr.f32.gmra.mrb[0].mxu0 %v394
          %v462 = vpop.f32.mrb[0].mxu0
          %v463 = vadd.f32 0.0, %v462
          %v464 = vpop.f32.mrb[0].mxu0
          %465 = vdwg.mxu0
          %v466 = vld [vmem:[%s4] sm:$0xff]
          %v467 = vld [vmem:[%s4 + $0x8] sm:$0xff]
          %v468 = vld [vmem:[%s4 + $0x10] sm:$0xff]
          %v469 = vld [vmem:[%s4 + $0x18] sm:$0xff]
          %470 = vmatprep.subr.mxu0 0.0
          %471 = vmatpush1.msra.mxu0 %v466
          %472 = vmatprep.subr.mxu0 0.0
          %473 = vmatpush1.msra.mxu0 %v467
          %474 = vmatprep.subr.mxu0 0.0
          %475 = vmatpush1.msra.mxu0 %v468
          %476 = vmatprep.subr.mxu0 0.0
          %477 = vmatpush1.msra.mxu0 %v469
          %478 = vmatprep.subr.mxu0 0.0
          %479 = vmatpush1.msra.mxu0 0.0
          %480 = vmatprep.subr.mxu0 0.0
          %481 = vmatpush1.msra.mxu0 0.0
          %482 = vmatprep.subr.mxu0 0.0
          %483 = vmatpush1.msra.mxu0 0.0
          %484 = vmatprep.subr.mxu0 0.0
          %485 = vmatpush1.msra.mxu0 0.0
          %486 = vmatprep.subr.mxu0 0.0
          %487 = vmatpush1.msra.mxu0 0.0
          %488 = vmatprep.subr.mxu0 0.0
          %489 = vmatpush1.msra.mxu0 0.0
          %490 = vmatprep.subr.mxu0 0.0
          %491 = vmatpush1.msra.mxu0 0.0
          %492 = vmatprep.subr.mxu0 0.0
          %493 = vmatpush1.msra.mxu0 0.0
          %494 = vmatprep.subr.mxu0 0.0
          %495 = vmatpush1.msra.mxu0 0.0
          %496 = vmatprep.subr.mxu0 0.0
          %497 = vmatpush1.msra.mxu0 0.0
          %498 = vmatprep.subr.mxu0 0.0
          %499 = vmatpush1.msra.mxu0 0.0
          %500 = vmatprep.subr.mxu0 0.0
          %501 = vmatpush1.msra.mxu0 0.0
          %502 = vmatprep.subr.mxu0 0.0
          %503 = vmatpush1.msra.mxu0 0.0
          %504 = vmatprep.subr.mxu0 0.0
          %505 = vmatpush1.msra.mxu0 0.0
          %506 = vmatprep.subr.mxu0 0.0
          %507 = vmatpush1.msra.mxu0 0.0
          %508 = vmatprep.subr.mxu0 0.0
          %509 = vmatpush1.msra.mxu0 0.0
          %510 = vmatprep.subr.mxu0 0.0
          %511 = vmatpush1.msra.mxu0 0.0
          %512 = vmatprep.subr.mxu0 0.0
          %513 = vmatpush1.msra.mxu0 0.0
          %514 = vmatprep.subr.mxu0 0.0
          %515 = vmatpush1.msra.mxu0 0.0
          %516 = vmatprep.subr.mxu0 0.0
          %517 = vmatpush1.msra.mxu0 0.0
          %518 = vmatprep.subr.mxu0 0.0
          %519 = vmatpush1.msra.mxu0 0.0
          %520 = vmatprep.subr.mxu0 0.0
          %521 = vmatpush1.msra.mxu0 0.0
          %522 = vmatprep.subr.mxu0 0.0
          %523 = vmatpush1.msra.mxu0 0.0
          %524 = vmatprep.subr.mxu0 0.0
          %525 = vmatpush1.msra.mxu0 0.0
          %526 = vmatprep.subr.mxu0 0.0
          %527 = vmatpush1.msra.mxu0 0.0
          %528 = vmatprep.subr.mxu0 0.0
          %529 = vmatpush1.msra.mxu0 0.0
          %530 = vmatprep.subr.mxu0 0.0
          %531 = vmatpush1.msra.mxu0 0.0
          %532 = vmatprep.subr.mxu0 0.0
          %533 = vmatpush1.msra.mxu0 0.0
          %534 = vmatprep.mubr.f32.mxu0 0.0
          %535 = vmatmul.mubr.f32.gmra.mrb[0].mxu0 %v394
          %v536 = vpop.f32.mrb[0].mxu0
          %v537 = vadd.f32 0.0, %v536
          %v538 = vpop.f32.mrb[0].mxu0
          %539 = vdwg.mxu0
          %v540 = vld [vmem:[#allocation2] sm:$0xff]
          %vm541 = vcmask 130048
          %v543 = vsel %vm541, %v540, 0
          %v546 = vsel %vm541, %v463, 0
          %548 = vmatprep.subr.mxu0 0.0
          %549 = vmatpush1.xpose.msra.mxu0 %v546
          %550 = vmatprep.subr.mxu0 0.0
          %551 = vmatpush1.xpose.msra.mxu0 0.0
          %552 = vmatprep.subr.mxu0 0.0
          %553 = vmatpush1.xpose.msra.mxu0 0.0
          %554 = vmatprep.subr.mxu0 0.0
          %555 = vmatpush1.xpose.msra.mxu0 0.0
          %556 = vmatprep.subr.mxu0 0.0
          %557 = vmatpush1.xpose.msra.mxu0 0.0
          %558 = vmatprep.subr.mxu0 0.0
          %559 = vmatpush1.xpose.msra.mxu0 0.0
          %560 = vmatprep.subr.mxu0 0.0
          %561 = vmatpush1.xpose.msra.mxu0 0.0
          %562 = vmatprep.subr.mxu0 0.0
          %563 = vmatpush1.xpose.msra.mxu0 0.0
          %564 = vmatprep.subr.mxu0 0.0
          %565 = vmatpush1.xpose.msra.mxu0 0.0
          %566 = vmatprep.subr.mxu0 0.0
          %567 = vmatpush1.xpose.msra.mxu0 0.0
          %568 = vmatprep.subr.mxu0 0.0
          %569 = vmatpush1.xpose.msra.mxu0 0.0
          %570 = vmatprep.subr.mxu0 0.0
          %571 = vmatpush1.xpose.msra.mxu0 0.0
          %572 = vmatprep.subr.mxu0 0.0
          %573 = vmatpush1.xpose.msra.mxu0 0.0
          %574 = vmatprep.subr.mxu0 0.0
          %575 = vmatpush1.xpose.msra.mxu0 0.0
          %576 = vmatprep.subr.mxu0 0.0
          %577 = vmatpush1.xpose.msra.mxu0 0.0
          %578 = vmatprep.subr.mxu0 0.0
          %579 = vmatpush1.xpose.msra.mxu0 0.0
          %580 = vmatprep.subr.mxu0 0.0
          %581 = vmatpush1.xpose.msra.mxu0 0.0
          %582 = vmatprep.subr.mxu0 0.0
          %583 = vmatpush1.xpose.msra.mxu0 0.0
          %584 = vmatprep.subr.mxu0 0.0
          %585 = vmatpush1.xpose.msra.mxu0 0.0
          %586 = vmatprep.subr.mxu0 0.0
          %587 = vmatpush1.xpose.msra.mxu0 0.0
          %588 = vmatprep.subr.mxu0 0.0
          %589 = vmatpush1.xpose.msra.mxu0 0.0
          %590 = vmatprep.subr.mxu0 0.0
          %591 = vmatpush1.xpose.msra.mxu0 0.0
          %592 = vmatprep.subr.mxu0 0.0
          %593 = vmatpush1.xpose.msra.mxu0 0.0
          %594 = vmatprep.subr.mxu0 0.0
          %595 = vmatpush1.xpose.msra.mxu0 0.0
          %596 = vmatprep.subr.mxu0 0.0
          %597 = vmatpush1.xpose.msra.mxu0 0.0
          %598 = vmatprep.subr.mxu0 0.0
          %599 = vmatpush1.xpose.msra.mxu0 0.0
          %600 = vmatprep.subr.mxu0 0.0
          %601 = vmatpush1.xpose.msra.mxu0 0.0
          %602 = vmatprep.subr.mxu0 0.0
          %603 = vmatpush1.xpose.msra.mxu0 0.0
          %604 = vmatprep.subr.mxu0 0.0
          %605 = vmatpush1.xpose.msra.mxu0 0.0
          %606 = vmatprep.subr.mxu0 0.0
          %607 = vmatpush1.xpose.msra.mxu0 0.0
          %608 = vmatprep.subr.mxu0 0.0
          %609 = vmatpush1.xpose.msra.mxu0 0.0
          %610 = vmatprep.subr.mxu0 0.0
          %611 = vmatpush1.xpose.msra.mxu0 0.0
          %612 = vmatprep.mubr.f32.mxu0 0.0
          %613 = vmatmul.mubr.f32.gmra.mrb[0].mxu0 %v543
          %v614 = vpop.f32.mrb[0].mxu0
          %v615 = vadd.f32 0.0, %v614
          %v616 = vpop.f32.mrb[0].mxu0
          %617 = vdwg.mxu0
          %s618 = smul.u32 %s25, 8
          %v619 = vlaneseq
          %v620 = vshrl.u32 %v619, 7
          %v621 = vstv %s618
          %v622 = vadd.s32 %v621, %v620
          %s623 = smul.u32 %s26, 8
          %v624 = vlaneseq
          %v625 = vand.u32 %v624, 127
          %v626 = vstv %s623
          %v627 = vadd.s32 %v626, %v625
          %vm628 = vcmp.gt.s32.totalorder %v627, %v622
          %vm629 = vcmp.eq.f32.partialorder %v615, 0.0
          %vm630 = vmor %vm628, %vm629
          %v631 = vsel %vm630, -inf, %v615
          %v632 = vld [vmem:[#allocation3] sm:$0xff]
          %vm633 = vcmask 64512
          %v634 = vsel %vm633, %v631, -inf
          %635 = vmax.xlane.f32.xlu0 %v634
          %v636 = vpop.xlane.xlu0 %635
          %v637 = vmax.f32 %v632, %v636
          %v638 = vsub.f32 %v632, %v637
          %v639 = vmul.f32 %v638, 1.442695
          %v640 = vpow.pop %v639
          %642 = vset.pattern.permute.xlu0 0
          %643 = vperm.xlu0 %642, %v637
          %v644 = vpop.permute.xlu0 %643
          %v646 = vsub.f32 %v631, %v644
          %v647 = vmul.f32 %v646, 1.442695
          %v648 = vpow.pop %v647
          %v649 = vld [vmem:[#allocation4] sm:$0xff]
          %v650 = vmul.f32 %v640, %v649
          %v651 = vsel %vm633, %v648, 0.0
          %652 = vadd.xlane.f32.xlu0 %v651
          %v653 = vpop.xlane.xlu0 %652
          %v654 = vadd.f32 %v650, %v653
          %vm655 = vcmask 7168
          %656 = vst.msk [vmem:[#allocation4] sm:$0xff] %vm655, %v654
          %v657 = vld [vmem:[#allocation5] sm:$0xff]
          %659 = vset.pattern.permute.xlu0 0
          %660 = vperm.xlu0 %659, %v640
          %v661 = vpop.permute.xlu0 %660
          %v663 = vmul.f32 %v661, %v657
          %v665 = vsel %vm633, %v648, 0
          %667 = vmatprep.subr.mxu0 0.0
          %668 = vmatpush1.msra.mxu0 %v537
          %669 = vmatprep.subr.mxu0 0.0
          %670 = vmatpush1.msra.mxu0 0.0
          %671 = vmatprep.subr.mxu0 0.0
          %672 = vmatpush1.msra.mxu0 0.0
          %673 = vmatprep.subr.mxu0 0.0
          %674 = vmatpush1.msra.mxu0 0.0
          %675 = vmatprep.subr.mxu0 0.0
          %676 = vmatpush1.msra.mxu0 0.0
          %677 = vmatprep.subr.mxu0 0.0
          %678 = vmatpush1.msra.mxu0 0.0
          %679 = vmatprep.subr.mxu0 0.0
          %680 = vmatpush1.msra.mxu0 0.0
          %681 = vmatprep.subr.mxu0 0.0
          %682 = vmatpush1.msra.mxu0 0.0
          %683 = vmatprep.subr.mxu0 0.0
          %684 = vmatpush1.msra.mxu0 0.0
          %685 = vmatprep.subr.mxu0 0.0
          %686 = vmatpush1.msra.mxu0 0.0
          %687 = vmatprep.subr.mxu0 0.0
          %688 = vmatpush1.msra.mxu0 0.0
          %689 = vmatprep.subr.mxu0 0.0
          %690 = vmatpush1.msra.mxu0 0.0
          %691 = vmatprep.subr.mxu0 0.0
          %692 = vmatpush1.msra.mxu0 0.0
          %693 = vmatprep.subr.mxu0 0.0
          %694 = vmatpush1.msra.mxu0 0.0
          %695 = vmatprep.subr.mxu0 0.0
          %696 = vmatpush1.msra.mxu0 0.0
          %697 = vmatprep.subr.mxu0 0.0
          %698 = vmatpush1.msra.mxu0 0.0
          %699 = vmatprep.subr.mxu0 0.0
          %700 = vmatpush1.msra.mxu0 0.0
          %701 = vmatprep.subr.mxu0 0.0
          %702 = vmatpush1.msra.mxu0 0.0
          %703 = vmatprep.subr.mxu0 0.0
          %704 = vmatpush1.msra.mxu0 0.0
          %705 = vmatprep.subr.mxu0 0.0
          %706 = vmatpush1.msra.mxu0 0.0
          %707 = vmatprep.subr.mxu0 0.0
          %708 = vmatpush1.msra.mxu0 0.0
          %709 = vmatprep.subr.mxu0 0.0
          %710 = vmatpush1.msra.mxu0 0.0
          %711 = vmatprep.subr.mxu0 0.0
          %712 = vmatpush1.msra.mxu0 0.0
          %713 = vmatprep.subr.mxu0 0.0
          %714 = vmatpush1.msra.mxu0 0.0
          %715 = vmatprep.subr.mxu0 0.0
          %716 = vmatpush1.msra.mxu0 0.0
          %717 = vmatprep.subr.mxu0 0.0
          %718 = vmatpush1.msra.mxu0 0.0
          %719 = vmatprep.subr.mxu0 0.0
          %720 = vmatpush1.msra.mxu0 0.0
          %721 = vmatprep.subr.mxu0 0.0
          %722 = vmatpush1.msra.mxu0 0.0
          %723 = vmatprep.subr.mxu0 0.0
          %724 = vmatpush1.msra.mxu0 0.0
          %725 = vmatprep.subr.mxu0 0.0
          %726 = vmatpush1.msra.mxu0 0.0
          %727 = vmatprep.subr.mxu0 0.0
          %728 = vmatpush1.msra.mxu0 0.0
          %729 = vmatprep.subr.mxu0 0.0
          %730 = vmatpush1.msra.mxu0 0.0
          %731 = vmatprep.mubr.f32.mxu0 0.0
          %732 = vmatmul.mubr.f32.gmra.mrb[0].mxu0 %v665
          %v733 = vpop.f32.mrb[0].mxu0
          %v734 = vadd.f32 0.0, %v733
          %v735 = vpop.f32.mrb[0].mxu0
          %736 = vdwg.mxu0
          %v737 = vadd.f32 %v663, %v734
          %738 = vst.msk [vmem:[#allocation5] sm:$0xff] %vm541, %v737
          %739 = vst.msk [vmem:[#allocation3] sm:$0xff] %vm655, %v637
        $region48: #{head_forward.1} parent=39 // pred_fallthru
          _
        %p740 = scmp.lt.s32.totalorder %s26, %s25
        // Predicated region
        $region49: #{head_forward.1} parent=39 // pred_check
          %p741 = pneg %p740
        $region50: #{head_forward.1} parent=39 // pred_check_branch
          %743 = sbr.rel (%p741) target = $region52
        $region51: #{head_forward.1} parent=39 // pred_region
          %v744 = vld [vmem:[%s291] sm:$0xff]
          %v745 = vld [vmem:[%s3] sm:$0xff]
          %v746 = vld [vmem:[%s3 + $0x8] sm:$0xff]
          %v747 = vld [vmem:[%s3 + $0x10] sm:$0xff]
          %v748 = vld [vmem:[%s3 + $0x18] sm:$0xff]
          %vm749 = vcmask 261120
          %v751 = vsel %vm749, %v744, 0
          %753 = vmatprep.subr.mxu0 0.0
          %754 = vmatpush1.msra.mxu0 %v745
          %755 = vmatprep.subr.mxu0 0.0
          %756 = vmatpush1.msra.mxu0 %v746
          %757 = vmatprep.subr.mxu0 0.0
          %758 = vmatpush1.msra.mxu0 %v747
          %759 = vmatprep.subr.mxu0 0.0
          %760 = vmatpush1.msra.mxu0 %v748
          %761 = vmatprep.subr.mxu0 0.0
          %762 = vmatpush1.msra.mxu0 0.0
          %763 = vmatprep.subr.mxu0 0.0
          %764 = vmatpush1.msra.mxu0 0.0
          %765 = vmatprep.subr.mxu0 0.0
          %766 = vmatpush1.msra.mxu0 0.0
          %767 = vmatprep.subr.mxu0 0.0
          %768 = vmatpush1.msra.mxu0 0.0
          %769 = vmatprep.subr.mxu0 0.0
          %770 = vmatpush1.msra.mxu0 0.0
          %771 = vmatprep.subr.mxu0 0.0
          %772 = vmatpush1.msra.mxu0 0.0
          %773 = vmatprep.subr.mxu0 0.0
          %774 = vmatpush1.msra.mxu0 0.0
          %775 = vmatprep.subr.mxu0 0.0
          %776 = vmatpush1.msra.mxu0 0.0
          %777 = vmatprep.subr.mxu0 0.0
          %778 = vmatpush1.msra.mxu0 0.0
          %779 = vmatprep.subr.mxu0 0.0
          %780 = vmatpush1.msra.mxu0 0.0
          %781 = vmatprep.subr.mxu0 0.0
          %782 = vmatpush1.msra.mxu0 0.0
          %783 = vmatprep.subr.mxu0 0.0
          %784 = vmatpush1.msra.mxu0 0.0
          %785 = vmatprep.subr.mxu0 0.0
          %786 = vmatpush1.msra.mxu0 0.0
          %787 = vmatprep.subr.mxu0 0.0
          %788 = vmatpush1.msra.mxu0 0.0
          %789 = vmatprep.subr.mxu0 0.0
          %790 = vmatpush1.msra.mxu0 0.0
          %791 = vmatprep.subr.mxu0 0.0
          %792 = vmatpush1.msra.mxu0 0.0
          %793 = vmatprep.subr.mxu0 0.0
          %794 = vmatpush1.msra.mxu0 0.0
          %795 = vmatprep.subr.mxu0 0.0
          %796 = vmatpush1.msra.mxu0 0.0
          %797 = vmatprep.subr.mxu0 0.0
          %798 = vmatpush1.msra.mxu0 0.0
          %799 = vmatprep.subr.mxu0 0.0
          %800 = vmatpush1.msra.mxu0 0.0
          %801 = vmatprep.subr.mxu0 0.0
          %802 = vmatpush1.msra.mxu0 0.0
          %803 = vmatprep.subr.mxu0 0.0
          %804 = vmatpush1.msra.mxu0 0.0
          %805 = vmatprep.subr.mxu0 0.0
          %806 = vmatpush1.msra.mxu0 0.0
          %807 = vmatprep.subr.mxu0 0.0
          %808 = vmatpush1.msra.mxu0 0.0
          %809 = vmatprep.subr.mxu0 0.0
          %810 = vmatpush1.msra.mxu0 0.0
          %811 = vmatprep.subr.mxu0 0.0
          %812 = vmatpush1.msra.mxu0 0.0
          %813 = vmatprep.subr.mxu0 0.0
          %814 = vmatpush1.msra.mxu0 0.0
          %815 = vmatprep.subr.mxu0 0.0
          %816 = vmatpush1.msra.mxu0 0.0
          %817 = vmatprep.mubr.f32.mxu0 0.0
          %818 = vmatmul.mubr.f32.gmra.mrb[0].mxu0 %v751
          %v819 = vpop.f32.mrb[0].mxu0
          %v820 = vadd.f32 0.0, %v819
          %v821 = vpop.f32.mrb[0].mxu0
          %822 = vdwg.mxu0
          %v823 = vld [vmem:[%s4] sm:$0xff]
          %v824 = vld [vmem:[%s4 + $0x8] sm:$0xff]
          %v825 = vld [vmem:[%s4 + $0x10] sm:$0xff]
          %v826 = vld [vmem:[%s4 + $0x18] sm:$0xff]
          %827 = vmatprep.subr.mxu0 0.0
          %828 = vmatpush1.msra.mxu0 %v823
          %829 = vmatprep.subr.mxu0 0.0
          %830 = vmatpush1.msra.mxu0 %v824
          %831 = vmatprep.subr.mxu0 0.0
          %832 = vmatpush1.msra.mxu0 %v825
          %833 = vmatprep.subr.mxu0 0.0
          %834 = vmatpush1.msra.mxu0 %v826
          %835 = vmatprep.subr.mxu0 0.0
          %836 = vmatpush1.msra.mxu0 0.0
          %837 = vmatprep.subr.mxu0 0.0
          %838 = vmatpush1.msra.mxu0 0.0
          %839 = vmatprep.subr.mxu0 0.0
          %840 = vmatpush1.msra.mxu0 0.0
          %841 = vmatprep.subr.mxu0 0.0
          %842 = vmatpush1.msra.mxu0 0.0
          %843 = vmatprep.subr.mxu0 0.0
          %844 = vmatpush1.msra.mxu0 0.0
          %845 = vmatprep.subr.mxu0 0.0
          %846 = vmatpush1.msra.mxu0 0.0
          %847 = vmatprep.subr.mxu0 0.0
          %848 = vmatpush1.msra.mxu0 0.0
          %849 = vmatprep.subr.mxu0 0.0
          %850 = vmatpush1.msra.mxu0 0.0
          %851 = vmatprep.subr.mxu0 0.0
          %852 = vmatpush1.msra.mxu0 0.0
          %853 = vmatprep.subr.mxu0 0.0
          %854 = vmatpush1.msra.mxu0 0.0
          %855 = vmatprep.subr.mxu0 0.0
          %856 = vmatpush1.msra.mxu0 0.0
          %857 = vmatprep.subr.mxu0 0.0
          %858 = vmatpush1.msra.mxu0 0.0
          %859 = vmatprep.subr.mxu0 0.0
          %860 = vmatpush1.msra.mxu0 0.0
          %861 = vmatprep.subr.mxu0 0.0
          %862 = vmatpush1.msra.mxu0 0.0
          %863 = vmatprep.subr.mxu0 0.0
          %864 = vmatpush1.msra.mxu0 0.0
          %865 = vmatprep.subr.mxu0 0.0
          %866 = vmatpush1.msra.mxu0 0.0
          %867 = vmatprep.subr.mxu0 0.0
          %868 = vmatpush1.msra.mxu0 0.0
          %869 = vmatprep.subr.mxu0 0.0
          %870 = vmatpush1.msra.mxu0 0.0
          %871 = vmatprep.subr.mxu0 0.0
          %872 = vmatpush1.msra.mxu0 0.0
          %873 = vmatprep.subr.mxu0 0.0
          %874 = vmatpush1.msra.mxu0 0.0
          %875 = vmatprep.subr.mxu0 0.0
          %876 = vmatpush1.msra.mxu0 0.0
          %877 = vmatprep.subr.mxu0 0.0
          %878 = vmatpush1.msra.mxu0 0.0
          %879 = vmatprep.subr.mxu0 0.0
          %880 = vmatpush1.msra.mxu0 0.0
          %881 = vmatprep.subr.mxu0 0.0
          %882 = vmatpush1.msra.mxu0 0.0
          %883 = vmatprep.subr.mxu0 0.0
          %884 = vmatpush1.msra.mxu0 0.0
          %885 = vmatprep.subr.mxu0 0.0
          %886 = vmatpush1.msra.mxu0 0.0
          %887 = vmatprep.subr.mxu0 0.0
          %888 = vmatpush1.msra.mxu0 0.0
          %889 = vmatprep.subr.mxu0 0.0
          %890 = vmatpush1.msra.mxu0 0.0
          %891 = vmatprep.mubr.f32.mxu0 0.0
          %892 = vmatmul.mubr.f32.gmra.mrb[0].mxu0 %v751
          %v893 = vpop.f32.mrb[0].mxu0
          %v894 = vadd.f32 0.0, %v893
          %v895 = vpop.f32.mrb[0].mxu0
          %896 = vdwg.mxu0
          %v897 = vld [vmem:[#allocation2] sm:$0xff]
          %vm898 = vcmask 130048
          %v900 = vsel %vm898, %v897, 0
          %v903 = vsel %vm898, %v820, 0
          %905 = vmatprep.subr.mxu0 0.0
          %906 = vmatpush1.xpose.msra.mxu0 %v903
          %907 = vmatprep.subr.mxu0 0.0
          %908 = vmatpush1.xpose.msra.mxu0 0.0
          %909 = vmatprep.subr.mxu0 0.0
          %910 = vmatpush1.xpose.msra.mxu0 0.0
          %911 = vmatprep.subr.mxu0 0.0
          %912 = vmatpush1.xpose.msra.mxu0 0.0
          %913 = vmatprep.subr.mxu0 0.0
          %914 = vmatpush1.xpose.msra.mxu0 0.0
          %915 = vmatprep.subr.mxu0 0.0
          %916 = vmatpush1.xpose.msra.mxu0 0.0
          %917 = vmatprep.subr.mxu0 0.0
          %918 = vmatpush1.xpose.msra.mxu0 0.0
          %919 = vmatprep.subr.mxu0 0.0
          %920 = vmatpush1.xpose.msra.mxu0 0.0
          %921 = vmatprep.subr.mxu0 0.0
          %922 = vmatpush1.xpose.msra.mxu0 0.0
          %923 = vmatprep.subr.mxu0 0.0
          %924 = vmatpush1.xpose.msra.mxu0 0.0
          %925 = vmatprep.subr.mxu0 0.0
          %926 = vmatpush1.xpose.msra.mxu0 0.0
          %927 = vmatprep.subr.mxu0 0.0
          %928 = vmatpush1.xpose.msra.mxu0 0.0
          %929 = vmatprep.subr.mxu0 0.0
          %930 = vmatpush1.xpose.msra.mxu0 0.0
          %931 = vmatprep.subr.mxu0 0.0
          %932 = vmatpush1.xpose.msra.mxu0 0.0
          %933 = vmatprep.subr.mxu0 0.0
          %934 = vmatpush1.xpose.msra.mxu0 0.0
          %935 = vmatprep.subr.mxu0 0.0
          %936 = vmatpush1.xpose.msra.mxu0 0.0
          %937 = vmatprep.subr.mxu0 0.0
          %938 = vmatpush1.xpose.msra.mxu0 0.0
          %939 = vmatprep.subr.mxu0 0.0
          %940 = vmatpush1.xpose.msra.mxu0 0.0
          %941 = vmatprep.subr.mxu0 0.0
          %942 = vmatpush1.xpose.msra.mxu0 0.0
          %943 = vmatprep.subr.mxu0 0.0
          %944 = vmatpush1.xpose.msra.mxu0 0.0
          %945 = vmatprep.subr.mxu0 0.0
          %946 = vmatpush1.xpose.msra.mxu0 0.0
          %947 = vmatprep.subr.mxu0 0.0
          %948 = vmatpush1.xpose.msra.mxu0 0.0
          %949 = vmatprep.subr.mxu0 0.0
          %950 = vmatpush1.xpose.msra.mxu0 0.0
          %951 = vmatprep.subr.mxu0 0.0
          %952 = vmatpush1.xpose.msra.mxu0 0.0
          %953 = vmatprep.subr.mxu0 0.0
          %954 = vmatpush1.xpose.msra.mxu0 0.0
          %955 = vmatprep.subr.mxu0 0.0
          %956 = vmatpush1.xpose.msra.mxu0 0.0
          %957 = vmatprep.subr.mxu0 0.0
          %958 = vmatpush1.xpose.msra.mxu0 0.0
          %959 = vmatprep.subr.mxu0 0.0
          %960 = vmatpush1.xpose.msra.mxu0 0.0
          %961 = vmatprep.subr.mxu0 0.0
          %962 = vmatpush1.xpose.msra.mxu0 0.0
          %963 = vmatprep.subr.mxu0 0.0
          %964 = vmatpush1.xpose.msra.mxu0 0.0
          %965 = vmatprep.subr.mxu0 0.0
          %966 = vmatpush1.xpose.msra.mxu0 0.0
          %967 = vmatprep.subr.mxu0 0.0
          %968 = vmatpush1.xpose.msra.mxu0 0.0
          %969 = vmatprep.mubr.f32.mxu0 0.0
          %970 = vmatmul.mubr.f32.gmra.mrb[0].mxu0 %v900
          %v971 = vpop.f32.mrb[0].mxu0
          %v972 = vadd.f32 0.0, %v971
          %v973 = vpop.f32.mrb[0].mxu0
          %974 = vdwg.mxu0
          %vm975 = vcmp.eq.f32.partialorder %v972, 0.0
          %v976 = vsel %vm975, -inf, %v972
          %v977 = vld [vmem:[#allocation3] sm:$0xff]
          %vm978 = vcmask 64512
          %v979 = vsel %vm978, %v976, -inf
          %980 = vmax.xlane.f32.xlu0 %v979
          %v981 = vpop.xlane.xlu0 %980
          %v982 = vmax.f32 %v977, %v981
          %v983 = vsub.f32 %v977, %v982
          %v984 = vmul.f32 %v983, 1.442695
          %v985 = vpow.pop %v984
          %987 = vset.pattern.permute.xlu0 0
          %988 = vperm.xlu0 %987, %v982
          %v989 = vpop.permute.xlu0 %988
          %v991 = vsub.f32 %v976, %v989
          %v992 = vmul.f32 %v991, 1.442695
          %v993 = vpow.pop %v992
          %v994 = vld [vmem:[#allocation4] sm:$0xff]
          %v995 = vmul.f32 %v985, %v994
          %v996 = vsel %vm978, %v993, 0.0
          %997 = vadd.xlane.f32.xlu0 %v996
          %v998 = vpop.xlane.xlu0 %997
          %v999 = vadd.f32 %v995, %v998
          %vm1000 = vcmask 7168
          %1001 = vst.msk [vmem:[#allocation4] sm:$0xff] %vm1000, %v999
          %v1002 = vld [vmem:[#allocation5] sm:$0xff]
          %1004 = vset.pattern.permute.xlu0 0
          %1005 = vperm.xlu0 %1004, %v985
          %v1006 = vpop.permute.xlu0 %1005
          %v1008 = vmul.f32 %v1006, %v1002
          %v1010 = vsel %vm978, %v993, 0
          %1012 = vmatprep.subr.mxu0 0.0
          %1013 = vmatpush1.msra.mxu0 %v894
          %1014 = vmatprep.subr.mxu0 0.0
          %1015 = vmatpush1.msra.mxu0 0.0
          %1016 = vmatprep.subr.mxu0 0.0
          %1017 = vmatpush1.msra.mxu0 0.0
          %1018 = vmatprep.subr.mxu0 0.0
          %1019 = vmatpush1.msra.mxu0 0.0
          %1020 = vmatprep.subr.mxu0 0.0
          %1021 = vmatpush1.msra.mxu0 0.0
          %1022 = vmatprep.subr.mxu0 0.0
          %1023 = vmatpush1.msra.mxu0 0.0
          %1024 = vmatprep.subr.mxu0 0.0
          %1025 = vmatpush1.msra.mxu0 0.0
          %1026 = vmatprep.subr.mxu0 0.0
          %1027 = vmatpush1.msra.mxu0 0.0
          %1028 = vmatprep.subr.mxu0 0.0
          %1029 = vmatpush1.msra.mxu0 0.0
          %1030 = vmatprep.subr.mxu0 0.0
          %1031 = vmatpush1.msra.mxu0 0.0
          %1032 = vmatprep.subr.mxu0 0.0
          %1033 = vmatpush1.msra.mxu0 0.0
          %1034 = vmatprep.subr.mxu0 0.0
          %1035 = vmatpush1.msra.mxu0 0.0
          %1036 = vmatprep.subr.mxu0 0.0
          %1037 = vmatpush1.msra.mxu0 0.0
          %1038 = vmatprep.subr.mxu0 0.0
          %1039 = vmatpush1.msra.mxu0 0.0
          %1040 = vmatprep.subr.mxu0 0.0
          %1041 = vmatpush1.msra.mxu0 0.0
          %1042 = vmatprep.subr.mxu0 0.0
          %1043 = vmatpush1.msra.mxu0 0.0
          %1044 = vmatprep.subr.mxu0 0.0
          %1045 = vmatpush1.msra.mxu0 0.0
          %1046 = vmatprep.subr.mxu0 0.0
          %1047 = vmatpush1.msra.mxu0 0.0
          %1048 = vmatprep.subr.mxu0 0.0
          %1049 = vmatpush1.msra.mxu0 0.0
          %1050 = vmatprep.subr.mxu0 0.0
          %1051 = vmatpush1.msra.mxu0 0.0
          %1052 = vmatprep.subr.mxu0 0.0
          %1053 = vmatpush1.msra.mxu0 0.0
          %1054 = vmatprep.subr.mxu0 0.0
          %1055 = vmatpush1.msra.mxu0 0.0
          %1056 = vmatprep.subr.mxu0 0.0
          %1057 = vmatpush1.msra.mxu0 0.0
          %1058 = vmatprep.subr.mxu0 0.0
          %1059 = vmatpush1.msra.mxu0 0.0
          %1060 = vmatprep.subr.mxu0 0.0
          %1061 = vmatpush1.msra.mxu0 0.0
          %1062 = vmatprep.subr.mxu0 0.0
          %1063 = vmatpush1.msra.mxu0 0.0
          %1064 = vmatprep.subr.mxu0 0.0
          %1065 = vmatpush1.msra.mxu0 0.0
          %1066 = vmatprep.subr.mxu0 0.0
          %1067 = vmatpush1.msra.mxu0 0.0
          %1068 = vmatprep.subr.mxu0 0.0
          %1069 = vmatpush1.msra.mxu0 0.0
          %1070 = vmatprep.subr.mxu0 0.0
          %1071 = vmatpush1.msra.mxu0 0.0
          %1072 = vmatprep.subr.mxu0 0.0
          %1073 = vmatpush1.msra.mxu0 0.0
          %1074 = vmatprep.subr.mxu0 0.0
          %1075 = vmatpush1.msra.mxu0 0.0
          %1076 = vmatprep.mubr.f32.mxu0 0.0
          %1077 = vmatmul.mubr.f32.gmra.mrb[0].mxu0 %v1010
          %v1078 = vpop.f32.mrb[0].mxu0
          %v1079 = vadd.f32 0.0, %v1078
          %v1080 = vpop.f32.mrb[0].mxu0
          %1081 = vdwg.mxu0
          %v1082 = vadd.f32 %v1008, %v1079
          %1083 = vst.msk [vmem:[#allocation5] sm:$0xff] %vm898, %v1082
          %1084 = vst.msk [vmem:[#allocation3] sm:$0xff] %vm1000, %v982
        $region52: #{head_forward.1} parent=39 // pred_fallthru
          _
        // Predicated region
        $region53: #{head_forward.1} parent=39 // pred_check
          %p1085 = pneg %p294
        $region54: #{head_forward.1} parent=39 // pred_check_branch
          %1087 = sbr.rel (%p1085) target = $region56
        $region55: #{head_forward.1} parent=39 // pred_region
          %v1088 = vld [vmem:[#allocation4] sm:$0xff]
          %v1089 = vrcp.pop %v1088
          %v1090 = vmul.f32 %v1088, %v1089
          %v1091 = vsub.f32 2.0, %v1090
          %v1092 = vmul.f32 %v1089, %v1091
          %v1093 = vld [vmem:[#allocation5] sm:$0xff]
          %1095 = vset.pattern.permute.xlu0 0
          %1096 = vperm.xlu0 %1095, %v1092
          %v1097 = vpop.permute.xlu0 %1096
          %v1099 = vmul.f32 %v1093, %v1097
          %vm1100 = vcmask 130048
          %1101 = vst.msk [vmem:[%s275] sm:$0xff] %vm1100, %v1099
        $region56: #{head_forward.1} parent=39 // pred_fallthru
          _
        %s1102 = sand.u32 %s171, 1
        %s1103 = scalar_lea.sflag [#allocation7], %s1102
        %s1104 = sand.u32 %s171, 1
        %s1105 = smul.addr %s1104, 8
        %s1106 = scalar_lea.vmem [#allocation6], %s1105
        // Predicated region
        $region57: #{head_forward.1} parent=39 // pred_check
          %p1107 = pneg %p181
        $region58: #{head_forward.1} parent=39 // pred_check_branch
          %1109 = sbr.rel (%p1107) target = $region60
        $region59: #{head_forward.1} parent=39 // pred_region
          %s1111 = ssub.s32 128, 128
          %1112 = vsyncadd %s1103, %s1111
          %s1113 = sadd.s32 %s25, %s24
          %s1114 = smul.addr %s1113, 128
          %s1115 = scalar_lea.hbm %s5, %s1114
          %s1117 = sshll.u32 %s1106, 4
          %s1118 = int_to_ptr.vmem [resolvable:$true] %s1117
          %1120 = dma.vmem_to_hbm [thread:$0]  %s1118, 128, %s1115, %s1103
        $region60: #{head_forward.1} parent=39 // pred_fallthru
          _
      $region40: #{head_forward.1} parent=5 // pred_fallthru
        _
      %p1121 = scmp.le.s32.totalorder 2, %s14
      // Predicated region
      $region61: #{head_forward.1} parent=5 // pred_check
        %p1122 = pneg %p1121
      $region62: #{head_forward.1} parent=5 // pred_check_branch
        %1124 = sbr.rel (%p1122) target = $region64
      $region63: #{head_forward.1} parent=5 // pred_region
        %s1125 = ssub.s32 %s14, 2
        // Predicated region
        $region65: #{head_forward.1} parent=63 // pred_check
          %p1126 = pneg %p187
        $region66: #{head_forward.1} parent=63 // pred_check_branch
          %1128 = sbr.rel (%p1126) target = $region68
        $region67: #{head_forward.1} parent=63 // pred_region
          %s1129 = sand.u32 %s172, 1
          %s1130 = scalar_lea.sflag [#allocation7], %s1129
          %s1131 = sand.u32 %s172, 1
          %s1132 = smul.addr %s1131, 8
          %s1133 = scalar_lea.vmem [#allocation6], %s1132
          %1134 = dma.done %s1130, 128
        $region68: #{head_forward.1} parent=63 // pred_fallthru
          _
      $region64: #{head_forward.1} parent=5 // pred_fallthru
        _
    $region6: #{head_forward.1} parent=1 // loop_footer
      %s18 = sadd.s32 1, %s14
    $region7: #{head_forward.1} parent=1 // loop_footer_branch
      %13 = sbr.rel target = $region3
    $region8: #{head_forward.1} parent=1 // loop_exit
      _
    %1135 = vsyncpa [#allocation7], 1
    %s1136 = scalar_lea.sflag [#allocation7], 1
    %1137 = vsyncpa %s1136, 1

</llo_original>
